<compile_context>
chip_gen: v6e
topology: v6e:2x2x1
jax: 0.10.0
libtpu: 0.0.40
codegen_flags: <defaults>
</compile_context>

<pallas_src>
import functools

import jax
import jax.numpy as jnp
from jax.experimental import pallas as pl
from jax.experimental.pallas import tpu as pltpu


def _round_up(x, m):
    return ((x + m - 1) // m) * m


# --------------------------------------------------------------------------- #
# Kernel
# --------------------------------------------------------------------------- #
def _pointgencon_kernel(x_ref,
                        w1_ref, b1_ref,
                        w2_ref, b2_ref,
                        w3_ref, b3_ref,
                        w4_ref, b4_ref,
                        o_ref):
    """Fused 4-layer pointwise MLP, channels on sublanes / points on lanes.

    x_ref : (C, tile_N)   f32 (cast to bf16 in-kernel)
    wK    : (C_out, C_in) bf16 (BN folded, hidden dims zero-padded to 128)
    bK    : (C_out, 1)    f32
    o_ref : (3, tile_N)   f32
    """
    h = x_ref[...].astype(jnp.bfloat16)                                 # (C, tn)

    h = jnp.dot(w1_ref[...], h, preferred_element_type=jnp.float32) + b1_ref[...]
    h = jnp.maximum(h, 0.0).astype(jnp.bfloat16)

    h = jnp.dot(w2_ref[...], h, preferred_element_type=jnp.float32) + b2_ref[...]
    h = jnp.maximum(h, 0.0).astype(jnp.bfloat16)

    h = jnp.dot(w3_ref[...], h, preferred_element_type=jnp.float32) + b3_ref[...]
    h = jnp.maximum(h, 0.0).astype(jnp.bfloat16)

    h = jnp.dot(w4_ref[...], h, preferred_element_type=jnp.float32) + b4_ref[...]
    o_ref[...] = jnp.tanh(h)                                            # (3, tn) f32


# --------------------------------------------------------------------------- #
# Parameter preparation (BN folding + channel padding)
# --------------------------------------------------------------------------- #
def fold_bn(w, b, gamma, beta, mean, var, eps=1e-5):
    """Fold eval-mode BatchNorm1d into the preceding 1x1 conv (f32 result)."""
    scale = gamma / jnp.sqrt(var + eps)                    # (C_out,)
    w_eff = w * scale[:, None]                             # (C_out, C_in)
    b_eff = scale * b + (beta - scale * mean)              # (C_out,)
    return w_eff.astype(jnp.float32), b_eff.astype(jnp.float32)


def prepare_kernel_params(folded, align=128):
    """Zero-pad hidden channel dims to `align`, cast W->bf16, b->(C_out,1) f32.

    Padded output rows have zero weight + zero bias (relu(0)=0) and the next
    layer's padded input columns are zero, so padding is exact.
    """
    (w1, b1), (w2, b2), (w3, b3), (w4, b4) = folded
    C1, C2, C3 = w1.shape[0], w2.shape[0], w3.shape[0]
    C1p, C2p, C3p = (_round_up(c, align) for c in (C1, C2, C3))

    def pad(w, b, out_p, in_p):
        co, ci = w.shape
        w = jnp.pad(w, ((0, out_p - co), (0, in_p - ci)))
        b = jnp.pad(b, ((0, out_p - b.shape[0]),))
        return w.astype(jnp.bfloat16), b.astype(jnp.float32).reshape(-1, 1)

    p1 = pad(w1, b1, C1p, w1.shape[1])   # (C1p, C)
    p2 = pad(w2, b2, C2p, C1p)           # (C2p, C1p)
    p3 = pad(w3, b3, C3p, C2p)           # (C3p, C2p)
    p4 = pad(w4, b4, w4.shape[0], C3p)   # (3,   C3p)
    return (p1, p2, p3, p4)


# --------------------------------------------------------------------------- #
# Forward wrapper
# --------------------------------------------------------------------------- #
def _vmem_capacity_bytes():
    try:
        return int(pltpu.get_tpu_info().vmem_capacity_bytes)
    except Exception:
        return 64 << 20   # conservative: v7x per-TC VMEM


def _estimate_vmem_bytes(C, C1, C2, C3, C4, tile):
    w = (C1 * C + C2 * C1 + C3 * C2 + C4 * C3) * 2                 # bf16, single-buffered
    b = sum(_round_up(c, 8) * 128 * 4 for c in (C1, C2, C3, C4))   # lane-padded f32
    x = 2 * C * tile * 4                                           # f32 input, 2 bufs
    o = 2 * _round_up(C4, 8) * tile * 4                            # output, 2 bufs
    inter = (C1 + max(C2, C3)) * tile * 4                          # live f32 intermediates
    return int((w + b + x + o + inter) * 1.25) + (4 << 20)


def _weight_spec(shape):
    """Constant-index (VMEM-resident) spec; single-buffered when supported."""
    idx = lambda n, b: (0, 0)
    try:
        return pl.BlockSpec(shape, idx, pipeline_mode=pl.Buffered(1))
    except TypeError:  # older BlockSpec without pipeline_mode kwarg
        return pl.BlockSpec(shape, idx)


@functools.partial(jax.jit, static_argnames=("tile", "vmem_limit"))
def _pointgencon_impl(x_ncw, kparams, *, tile, vmem_limit):
    B, C, N = x_ncw.shape
    (w1, b1), (w2, b2), (w3, b3), (w4, b4) = kparams
    C1, C2, C3, C4 = w1.shape[0], w2.shape[0], w3.shape[0], w4.shape[0]

    n_pad = _round_up(N, tile)
    x = x_ncw
    if n_pad != N:
        # TODO(synk): replace materialized pad with Pallas partial-block masking.
        x = jnp.pad(x, ((0, 0), (0, 0), (0, n_pad - N)))

    grid = (n_pad // tile, B)            # point-tile axis first -> megacore shards it

    def x_map(n, b):
        return (b, 0, n)

    out = pl.pallas_call(
        _pointgencon_kernel,
        out_shape=jax.ShapeDtypeStruct((B, C4, n_pad), jnp.float32),
        grid_spec=pltpu.PrefetchScalarGridSpec(
            num_scalar_prefetch=0,
            grid=grid,
            in_specs=[
                pl.BlockSpec((None, C, tile), x_map),     # x tile (C, tile) f32
                _weight_spec((C1, C)),  _weight_spec((C1, 1)),   # w1/b1 (bn1 folded)
                _weight_spec((C2, C1)), _weight_spec((C2, 1)),   # w2/b2 (bn2 folded)
                _weight_spec((C3, C2)), _weight_spec((C3, 1)),   # w3/b3 (bn3 folded)
                _weight_spec((C4, C3)), _weight_spec((C4, 1)),   # w4/b4
            ],
            out_specs=pl.BlockSpec((None, C4, tile), x_map),
        ),
        compiler_params=pltpu.CompilerParams(
            dimension_semantics=("parallel", "parallel"),
            vmem_limit_bytes=vmem_limit),
    )(x, w1, b1, w2, b2, w3, b3, w4, b4)

    if n_pad != N:
        out = out[:, :, :N]
    return out


def pointgencon_forward(x_ncw, kparams, tile_n=None):
    """x_ncw: (B, C, N) float32 (PyTorch Conv1d layout). Returns (B, 3, N) float32."""
    B, C, N = x_ncw.shape
    (w1, _), (w2, _), (w3, _), (w4, _) = kparams
    C1, C2, C3, C4 = w1.shape[0], w2.shape[0], w3.shape[0], w4.shape[0]

    cap = _vmem_capacity_bytes()
    if tile_n is None:
        if C >= 2048:                       # realistic bottleneck (~2500): keep tiles modest
            tile_n = 256 if cap <= (64 << 20) else 512
        else:                               # small C: amortize per-step overhead
            tile_n = 1024 if cap >= (96 << 20) else 512

    n_aligned = _round_up(N, 128)           # lane-aligned even in the small-N fast path
    if n_aligned <= tile_n:
        tile = n_aligned
    else:
        tile = max(128, (tile_n // 128) * 128)

    vmem_limit = _estimate_vmem_bytes(C, C1, C2, C3, C4, tile)
    vmem_limit = max(32 << 20, vmem_limit)
    vmem_limit = min(vmem_limit, min(100 << 20, int(cap * 0.9)))

    return _pointgencon_impl(x_ncw, kparams, tile=tile, vmem_limit=vmem_limit)


# --------------------------------------------------------------------------- #
# Pure-JAX reference & synthetic params
# --------------------------------------------------------------------------- #
def pointgencon_reference(x_ncw, kparams):
    """Pure-JAX f32 reference using the same (padded, bf16-rounded) weights."""
    (w1, b1), (w2, b2), (w3, b3), (w4, b4) = kparams

    def layer(h, w, b, act):
        y = jnp.einsum("oc,bcn->bon", w.astype(jnp.float32), h) + b[None, :, :]
        return act(y)

    h = layer(x_ncw.astype(jnp.float32), w1, b1, jax.nn.relu)
    h = layer(h, w2, b2, jax.nn.relu)
    h = layer(h, w3, b3, jax.nn.relu)
    return layer(h, w4, b4, jnp.tanh)


def make_params(bottleneck_size, key):
    """Deterministic synthetic parameters matching PointGenCon.__init__ shapes,
    with eval-mode BN folded into the convs (f32, unpadded)."""
    C = bottleneck_size
    C2, C3, C4 = C // 2, C // 4, 3
    keys = jax.random.split(key, 11)

    def conv_w(k, co, ci):
        return jax.random.normal(k, (co, ci), jnp.float32) / jnp.sqrt(ci)

    def conv_b(k, co):
        return 0.01 * jax.random.normal(k, (co,), jnp.float32)

    def bn(k, c):
        k1, k2, k3, k4 = jax.random.split(k, 4)
        gamma = 1.0 + 0.1 * jax.random.normal(k1, (c,), jnp.float32)
        beta = 0.05 * jax.random.normal(k2, (c,), jnp.float32)
        mean = 0.1 * jax.random.normal(k3, (c,), jnp.float32)
        var = 1.0 + 0.1 * jax.random.uniform(k4, (c,), jnp.float32)
        return gamma, beta, mean, var

    w1, b1 = conv_w(keys[0], C, C), conv_b(keys[1], C)
    w2, b2 = conv_w(keys[2], C2, C), conv_b(keys[3], C2)
    w3, b3 = conv_w(keys[4], C3, C2), conv_b(keys[5], C3)
    w4, b4 = conv_w(keys[6], C4, C3), conv_b(keys[7], C4)

    f1 = fold_bn(w1, b1, *bn(keys[8], C))
    f2 = fold_bn(w2, b2, *bn(keys[9], C2))
    f3 = fold_bn(w3, b3, *bn(keys[10], C3))
    f4 = (w4, b4)
    return (f1, f2, f3, f4)


if __name__ == "__main__":
    bottleneck_size = 256   # small, divisible by 4 (original default is 2500)
    B, N = 2, 16            # batch, number of points

    key = jax.random.PRNGKey(0)
    kx, kp = jax.random.split(key)

    x = jax.random.normal(kx, (B, bottleneck_size, N), jnp.float32)   # NCW layout
    folded = make_params(bottleneck_size, kp)
    kparams = prepare_kernel_params(folded)

    y = pointgencon_forward(x, kparams)
    y = jax.block_until_ready(y)

    assert y.shape == (B, 3, N)
    assert bool(jnp.all(jnp.isfinite(y)))
    assert bool(jnp.all(jnp.abs(y) <= 1.0))   # tanh output range

    # Validate the bf16 MXU path against a pure-JAX f32 reference.
    y_ref = pointgencon_reference(x, kparams)
    max_err = float(jnp.max(jnp.abs(y - y_ref)))
    assert max_err < 5e-2, f"max abs error {max_err} too large"

    print("KERNEL_OK")
</pallas_src>

<mosaic_0001>
module attributes {stable_mosaic.version = 11 : i64} {
  func.func @_pointgencon_kernel(%arg0: i32, %arg1: i32, %arg2: memref<1x256x128xf32, #tpu.memory_space<vmem>>, %arg3: memref<256x256xbf16, #tpu.memory_space<vmem>>, %arg4: memref<256x1xf32, #tpu.memory_space<vmem>>, %arg5: memref<128x256xbf16, #tpu.memory_space<vmem>>, %arg6: memref<128x1xf32, #tpu.memory_space<vmem>>, %arg7: memref<128x128xbf16, #tpu.memory_space<vmem>>, %arg8: memref<128x1xf32, #tpu.memory_space<vmem>>, %arg9: memref<3x128xbf16, #tpu.memory_space<vmem>>, %arg10: memref<3x1xf32, #tpu.memory_space<vmem>>, %arg11: memref<1x3x128xf32, #tpu.memory_space<vmem>>) attributes {dimension_semantics = [#tpu.dimension_semantics<parallel>, #tpu.dimension_semantics<parallel>], iteration_bounds = array<i64: 1, 2>, scalar_prefetch = 0 : i64, scratch_operands = 0 : i64, tpu.core_type = #tpu.core_type<tc>, window_params = [{transform_indices = @transform_0, window_bounds = array<i64: 1, 256, 128>}, {pipeline_mode = #tpu.pipeline_mode<synchronous>, transform_indices = @transform_1, window_bounds = array<i64: 256, 256>}, {pipeline_mode = #tpu.pipeline_mode<synchronous>, transform_indices = @transform_2, window_bounds = array<i64: 256, 1>}, {pipeline_mode = #tpu.pipeline_mode<synchronous>, transform_indices = @transform_3, window_bounds = array<i64: 128, 256>}, {pipeline_mode = #tpu.pipeline_mode<synchronous>, transform_indices = @transform_4, window_bounds = array<i64: 128, 1>}, {pipeline_mode = #tpu.pipeline_mode<synchronous>, transform_indices = @transform_5, window_bounds = array<i64: 128, 128>}, {pipeline_mode = #tpu.pipeline_mode<synchronous>, transform_indices = @transform_6, window_bounds = array<i64: 128, 1>}, {pipeline_mode = #tpu.pipeline_mode<synchronous>, transform_indices = @transform_7, window_bounds = array<i64: 3, 128>}, {pipeline_mode = #tpu.pipeline_mode<synchronous>, transform_indices = @transform_8, window_bounds = array<i64: 3, 1>}, {transform_indices = @transform_9, window_bounds = array<i64: 1, 3, 128>}]} {
    %c0 = arith.constant 0 : index
    %c0_0 = arith.constant 0 : index
    %c0_1 = arith.constant 0 : index
    %0 = vector.load %arg2[%c0, %c0_0, %c0_1] : memref<1x256x128xf32, #tpu.memory_space<vmem>>, vector<1x256x128xf32>
    %1 = vector.shape_cast %0 : vector<1x256x128xf32> to vector<256x128xf32>
    %2 = arith.truncf %1 : vector<256x128xf32> to vector<256x128xbf16>
    %c0_2 = arith.constant 0 : index
    %c0_3 = arith.constant 0 : index
    %3 = vector.load %arg3[%c0_2, %c0_3] : memref<256x256xbf16, #tpu.memory_space<vmem>>, vector<256x256xbf16>
    %cst = arith.constant dense<0.000000e+00> : vector<256x128xf32>
    %4 = tpu.matmul %3, %2, %cst {dimension_numbers = #tpu.dot_dimension_numbers<[1], [0], [0], [1], [0, 0, 1, 1], [], []>} : vector<256x256xbf16>, vector<256x128xbf16>, vector<256x128xf32> -> vector<256x128xf32>
    %c0_4 = arith.constant 0 : index
    %c0_5 = arith.constant 0 : index
    %5 = vector.load %arg4[%c0_4, %c0_5] : memref<256x1xf32, #tpu.memory_space<vmem>>, vector<256x1xf32>
    %6 = vector.broadcast %5 : vector<256x1xf32> to vector<256x128xf32>
    %7 = arith.addf %4, %6 : vector<256x128xf32>
    %cst_6 = arith.constant 0.000000e+00 : f32
    %8 = vector.broadcast %cst_6 : f32 to vector<256x128xf32>
    %9 = arith.maximumf %7, %8 : vector<256x128xf32>
    %10 = arith.truncf %9 : vector<256x128xf32> to vector<256x128xbf16>
    %c0_7 = arith.constant 0 : index
    %c0_8 = arith.constant 0 : index
    %11 = vector.load %arg5[%c0_7, %c0_8] : memref<128x256xbf16, #tpu.memory_space<vmem>>, vector<128x256xbf16>
    %cst_9 = arith.constant dense<0.000000e+00> : vector<128x128xf32>
    %12 = tpu.matmul %11, %10, %cst_9 {dimension_numbers = #tpu.dot_dimension_numbers<[1], [0], [0], [1], [0, 0, 1, 1], [], []>} : vector<128x256xbf16>, vector<256x128xbf16>, vector<128x128xf32> -> vector<128x128xf32>
    %c0_10 = arith.constant 0 : index
    %c0_11 = arith.constant 0 : index
    %13 = vector.load %arg6[%c0_10, %c0_11] : memref<128x1xf32, #tpu.memory_space<vmem>>, vector<128x1xf32>
    %14 = vector.broadcast %13 : vector<128x1xf32> to vector<128x128xf32>
    %15 = arith.addf %12, %14 : vector<128x128xf32>
    %cst_12 = arith.constant 0.000000e+00 : f32
    %16 = vector.broadcast %cst_12 : f32 to vector<128x128xf32>
    %17 = arith.maximumf %15, %16 : vector<128x128xf32>
    %18 = arith.truncf %17 : vector<128x128xf32> to vector<128x128xbf16>
    %c0_13 = arith.constant 0 : index
    %c0_14 = arith.constant 0 : index
    %19 = vector.load %arg7[%c0_13, %c0_14] : memref<128x128xbf16, #tpu.memory_space<vmem>>, vector<128x128xbf16>
    %cst_15 = arith.constant dense<0.000000e+00> : vector<128x128xf32>
    %20 = tpu.matmul %19, %18, %cst_15 {dimension_numbers = #tpu.dot_dimension_numbers<[1], [0], [0], [1], [0, 0, 1, 1], [], []>} : vector<128x128xbf16>, vector<128x128xbf16>, vector<128x128xf32> -> vector<128x128xf32>
    %c0_16 = arith.constant 0 : index
    %c0_17 = arith.constant 0 : index
    %21 = vector.load %arg8[%c0_16, %c0_17] : memref<128x1xf32, #tpu.memory_space<vmem>>, vector<128x1xf32>
    %22 = vector.broadcast %21 : vector<128x1xf32> to vector<128x128xf32>
    %23 = arith.addf %20, %22 : vector<128x128xf32>
    %cst_18 = arith.constant 0.000000e+00 : f32
    %24 = vector.broadcast %cst_18 : f32 to vector<128x128xf32>
    %25 = arith.maximumf %23, %24 : vector<128x128xf32>
    %26 = arith.truncf %25 : vector<128x128xf32> to vector<128x128xbf16>
    %c0_19 = arith.constant 0 : index
    %c0_20 = arith.constant 0 : index
    %27 = vector.load %arg9[%c0_19, %c0_20] : memref<3x128xbf16, #tpu.memory_space<vmem>>, vector<3x128xbf16>
    %cst_21 = arith.constant dense<0.000000e+00> : vector<3x128xf32>
    %28 = tpu.matmul %27, %26, %cst_21 {dimension_numbers = #tpu.dot_dimension_numbers<[1], [0], [0], [1], [0, 0, 1, 1], [], []>} : vector<3x128xbf16>, vector<128x128xbf16>, vector<3x128xf32> -> vector<3x128xf32>
    %c0_22 = arith.constant 0 : index
    %c0_23 = arith.constant 0 : index
    %29 = vector.load %arg10[%c0_22, %c0_23] : memref<3x1xf32, #tpu.memory_space<vmem>>, vector<3x1xf32>
    %30 = vector.broadcast %29 : vector<3x1xf32> to vector<3x128xf32>
    %31 = arith.addf %28, %30 : vector<3x128xf32>
    %32 = math.tanh %31 : vector<3x128xf32>
    %c0_24 = arith.constant 0 : index
    %c0_25 = arith.constant 0 : index
    %c0_26 = arith.constant 0 : index
    %33 = vector.load %arg11[%c0_24, %c0_25, %c0_26] : memref<1x3x128xf32, #tpu.memory_space<vmem>>, vector<1x3x128xf32>
    %34 = vector.shape_cast %33 : vector<1x3x128xf32> to vector<3x128xf32>
    %35 = vector.shape_cast %32 : vector<3x128xf32> to vector<1x3x128xf32>
    tpu.vector_store %arg11[%c0_24, %c0_25, %c0_26], %35 {strides = array<i32>} : memref<1x3x128xf32, #tpu.memory_space<vmem>>, vector<1x3x128xf32>,
    return
  }
  func.func @transform_0(%arg0: i32, %arg1: i32) -> (i32, i32, i32) {
    %c0_i32 = arith.constant 0 : i32
    %c0_i32_0 = arith.constant 0 : i32
    return %arg1, %c0_i32, %arg0 : i32, i32, i32
  }
  func.func @transform_1(%arg0: i32, %arg1: i32) -> (i32, i32) {
    %c0_i32 = arith.constant 0 : i32
    %c0_i32_0 = arith.constant 0 : i32
    %c0_i32_1 = arith.constant 0 : i32
    return %c0_i32, %c0_i32_0 : i32, i32
  }
  func.func @transform_2(%arg0: i32, %arg1: i32) -> (i32, i32) {
    %c0_i32 = arith.constant 0 : i32
    %c0_i32_0 = arith.constant 0 : i32
    %c0_i32_1 = arith.constant 0 : i32
    return %c0_i32, %c0_i32_0 : i32, i32
  }
  func.func @transform_3(%arg0: i32, %arg1: i32) -> (i32, i32) {
    %c0_i32 = arith.constant 0 : i32
    %c0_i32_0 = arith.constant 0 : i32
    %c0_i32_1 = arith.constant 0 : i32
    return %c0_i32, %c0_i32_0 : i32, i32
  }
  func.func @transform_4(%arg0: i32, %arg1: i32) -> (i32, i32) {
    %c0_i32 = arith.constant 0 : i32
    %c0_i32_0 = arith.constant 0 : i32
    %c0_i32_1 = arith.constant 0 : i32
    return %c0_i32, %c0_i32_0 : i32, i32
  }
  func.func @transform_5(%arg0: i32, %arg1: i32) -> (i32, i32) {
    %c0_i32 = arith.constant 0 : i32
    %c0_i32_0 = arith.constant 0 : i32
    %c0_i32_1 = arith.constant 0 : i32
    return %c0_i32, %c0_i32_0 : i32, i32
  }
  func.func @transform_6(%arg0: i32, %arg1: i32) -> (i32, i32) {
    %c0_i32 = arith.constant 0 : i32
    %c0_i32_0 = arith.constant 0 : i32
    %c0_i32_1 = arith.constant 0 : i32
    return %c0_i32, %c0_i32_0 : i32, i32
  }
  func.func @transform_7(%arg0: i32, %arg1: i32) -> (i32, i32) {
    %c0_i32 = arith.constant 0 : i32
    %c0_i32_0 = arith.constant 0 : i32
    %c0_i32_1 = arith.constant 0 : i32
    return %c0_i32, %c0_i32_0 : i32, i32
  }
  func.func @transform_8(%arg0: i32, %arg1: i32) -> (i32, i32) {
    %c0_i32 = arith.constant 0 : i32
    %c0_i32_0 = arith.constant 0 : i32
    %c0_i32_1 = arith.constant 0 : i32
    return %c0_i32, %c0_i32_0 : i32, i32
  }
  func.func @transform_9(%arg0: i32, %arg1: i32) -> (i32, i32, i32) {
    %c0_i32 = arith.constant 0 : i32
    %c0_i32_0 = arith.constant 0 : i32
    return %arg1, %c0_i32, %arg0 : i32, i32, i32
  }
}

</mosaic_0001>

<llo_original>
// kernel: _pointgencon_impl.1
$region0: #{_pointgencon_impl.1}
  #allocation0 [shape = 'u32[]', space=smem, size = 0x4, offset = 0x4, fixed_abs, tag = 'smem constant byte address 0x4 - core index']
  #allocation1 [shape = 'u32[144,128]{1,0:T(1,128)}', space=vmem, size = 0x12000, scoped, tag = 'internal scratch']
  %s0 = inlined_call_operand.vmem [shape: f32[2,256,128], index: 0, kind: input, shape index: {}]
  %s1 = inlined_call_operand.vmem [shape: bf16[256,256], index: 1, kind: input, shape index: {}]
  %s2 = inlined_call_operand.vmem [shape: f32[256,1], index: 2, kind: input, shape index: {}]
  %s3 = inlined_call_operand.vmem [shape: bf16[128,256], index: 3, kind: input, shape index: {}]
  %s4 = inlined_call_operand.vmem [shape: f32[128,1], index: 4, kind: input, shape index: {}]
  %s5 = inlined_call_operand.vmem [shape: bf16[128,128], index: 5, kind: input, shape index: {}]
  %s6 = inlined_call_operand.vmem [shape: f32[128,1], index: 6, kind: input, shape index: {}]
  %s7 = inlined_call_operand.vmem [shape: bf16[3,128], index: 7, kind: input, shape index: {}]
  %s8 = inlined_call_operand.vmem [shape: f32[3,1], index: 8, kind: input, shape index: {}]
  %s9 = inlined_call_operand.vmem [shape: f32[2,3,128], index: 9, kind: output, shape index: {}]
  %s10 = sld [smem:[#allocation0]]
  $region69: #{_pointgencon_impl.1} parent=0
    _
  %s12 = ssub.s32 1, %s10
  %s13 = scalar_select 0, %s12, %s10
  loop: start=0, step=1, limit=4
  $region2: #{_pointgencon_impl.1} parent=0 // loop_pre_header
    _
  $region3: #{_pointgencon_impl.1} parent=0 // loop_header
    %s15 = sphi 0, %s19
    %p16 = scmp.ge.s32.totalorder %s15, 4
    %s22 = sphi 0, %s34
    %s23 = sphi 0, %s30
    %s24 = sphi 0, %s22
    %s25 = sphi 0, %s23
    %s26 = sphi 0, %s24
    %s27 = sphi 0, %s25
    %s39 = sphi 0, %s41
    %s42 = sphi 0, %s39
    %s43 = sphi 0, %s42
    %s59 = sphi 0, %s43
    %s63 = sphi 0, %s63
    %s65 = sphi 0, %s63
    %s66 = sphi 0, %s65
    %s80 = sphi 0, %s66
    %s84 = sphi 0, %s84
    %s86 = sphi 0, %s84
    %s87 = sphi 0, %s86
    %s101 = sphi 0, %s87
    %s105 = sphi 0, %s105
    %s107 = sphi 0, %s105
    %s108 = sphi 0, %s107
    %s122 = sphi 0, %s108
    %s126 = sphi 0, %s126
    %s128 = sphi 0, %s126
    %s129 = sphi 0, %s128
    %s143 = sphi 0, %s129
    %s147 = sphi 0, %s147
    %s149 = sphi 0, %s147
    %s150 = sphi 0, %s149
    %s164 = sphi 0, %s150
    %s168 = sphi 0, %s168
    %s170 = sphi 0, %s168
    %s171 = sphi 0, %s170
    %s185 = sphi 0, %s171
    %s189 = sphi 0, %s189
    %s191 = sphi 0, %s189
    %s192 = sphi 0, %s191
    %s206 = sphi 0, %s192
    %s210 = sphi 0, %s210
    %s212 = sphi 0, %s210
    %s213 = sphi 0, %s212
    %s227 = sphi 0, %s213
    %s235 = sphi 0, %s237
    %s238 = sphi 0, %s235
    %s239 = sphi 0, %s238
    %s255 = sphi 0, %s239
  $region4: #{_pointgencon_impl.1} parent=0 // loop_header_branch
    %18 = sbr.rel (%p16) target = $region8
  $region5: #{_pointgencon_impl.1} parent=0 // loop_body
    %s20 = ssub.s32 %s15, 1
    %s21 = ssub.s32 %s15, 2
    %s28 = sadd.s32 1, %s23
    %p29 = scmp.ge.s32.totalorder %s28, 2
    %s30 = scalar_select %p29, 0, %s28
    %s31 = sadd.s32 1, %s22
    %s32 = scalar_select %p29, %s31, %s22
    %p33 = scmp.ge.s32.totalorder %s32, 1
    %s34 = scalar_select %p33, 0, %s32
    %s35 = ssub.s32 %s23, %s30
    %s36 = ssub.s32 %s22, %s34
    %s37 = sor.u32 %s35, %s36
    %p38 = scmp.eq.s32.totalorder %s37, 0
    %s40 = sadd.s32 %s39, 1
    %s41 = scalar_select %p38, %s39, %s40
    %p44 = pneg %p38
    %p45 = scmp.eq.s32.totalorder %s15, 1
    %p46 = por %p44, %p45
    %p47 = scmp.ne.s32.totalorder %s39, %s42
    %p48 = scmp.eq.s32.totalorder %s15, 0
    %p49 = por %p47, %p48
    %p50 = scmp.ne.s32.totalorder %s39, %s42
    %p51 = scmp.eq.s32.totalorder %s20, 1
    %p52 = por %p50, %p51
    %p53 = scmp.ne.s32.totalorder %s42, %s43
    %p54 = scmp.eq.s32.totalorder %s20, 0
    %p55 = por %p53, %p54
    %p56 = scmp.ne.s32.totalorder %s42, %s43
    %p57 = scmp.eq.s32.totalorder %s21, 1
    %p58 = por %p56, %p57
    %p60 = scmp.ne.s32.totalorder %s43, %s59
    %p61 = scmp.eq.s32.totalorder %s21, 0
    %p62 = por %p60, %p61
    %s64 = sadd.s32 %s63, 1
    %p67 = scmp.eq.s32.totalorder %s15, 1
    %p68 = scmp.ne.s32.totalorder %s63, %s65
    %p69 = scmp.eq.s32.totalorder %s15, 0
    %p70 = por %p68, %p69
    %p71 = scmp.ne.s32.totalorder %s63, %s65
    %p72 = scmp.eq.s32.totalorder %s20, 1
    %p73 = por %p71, %p72
    %p74 = scmp.ne.s32.totalorder %s65, %s66
    %p75 = scmp.eq.s32.totalorder %s20, 0
    %p76 = por %p74, %p75
    %p77 = scmp.ne.s32.totalorder %s65, %s66
    %p78 = scmp.eq.s32.totalorder %s21, 1
    %p79 = por %p77, %p78
    %p81 = scmp.ne.s32.totalorder %s66, %s80
    %p82 = scmp.eq.s32.totalorder %s21, 0
    %p83 = por %p81, %p82
    %s85 = sadd.s32 %s84, 1
    %p88 = scmp.eq.s32.totalorder %s15, 1
    %p89 = scmp.ne.s32.totalorder %s84, %s86
    %p90 = scmp.eq.s32.totalorder %s15, 0
    %p91 = por %p89, %p90
    %p92 = scmp.ne.s32.totalorder %s84, %s86
    %p93 = scmp.eq.s32.totalorder %s20, 1
    %p94 = por %p92, %p93
    %p95 = scmp.ne.s32.totalorder %s86, %s87
    %p96 = scmp.eq.s32.totalorder %s20, 0
    %p97 = por %p95, %p96
    %p98 = scmp.ne.s32.totalorder %s86, %s87
    %p99 = scmp.eq.s32.totalorder %s21, 1
    %p100 = por %p98, %p99
    %p102 = scmp.ne.s32.totalorder %s87, %s101
    %p103 = scmp.eq.s32.totalorder %s21, 0
    %p104 = por %p102, %p103
    %s106 = sadd.s32 %s105, 1
    %p109 = scmp.eq.s32.totalorder %s15, 1
    %p110 = scmp.ne.s32.totalorder %s105, %s107
    %p111 = scmp.eq.s32.totalorder %s15, 0
    %p112 = por %p110, %p111
    %p113 = scmp.ne.s32.totalorder %s105, %s107
    %p114 = scmp.eq.s32.totalorder %s20, 1
    %p115 = por %p113, %p114
    %p116 = scmp.ne.s32.totalorder %s107, %s108
    %p117 = scmp.eq.s32.totalorder %s20, 0
    %p118 = por %p116, %p117
    %p119 = scmp.ne.s32.totalorder %s107, %s108
    %p120 = scmp.eq.s32.totalorder %s21, 1
    %p121 = por %p119, %p120
    %p123 = scmp.ne.s32.totalorder %s108, %s122
    %p124 = scmp.eq.s32.totalorder %s21, 0
    %p125 = por %p123, %p124
    %s127 = sadd.s32 %s126, 1
    %p130 = scmp.eq.s32.totalorder %s15, 1
    %p131 = scmp.ne.s32.totalorder %s126, %s128
    %p132 = scmp.eq.s32.totalorder %s15, 0
    %p133 = por %p131, %p132
    %p134 = scmp.ne.s32.totalorder %s126, %s128
    %p135 = scmp.eq.s32.totalorder %s20, 1
    %p136 = por %p134, %p135
    %p137 = scmp.ne.s32.totalorder %s128, %s129
    %p138 = scmp.eq.s32.totalorder %s20, 0
    %p139 = por %p137, %p138
    %p140 = scmp.ne.s32.totalorder %s128, %s129
    %p141 = scmp.eq.s32.totalorder %s21, 1
    %p142 = por %p140, %p141
    %p144 = scmp.ne.s32.totalorder %s129, %s143
    %p145 = scmp.eq.s32.totalorder %s21, 0
    %p146 = por %p144, %p145
    %s148 = sadd.s32 %s147, 1
    %p151 = scmp.eq.s32.totalorder %s15, 1
    %p152 = scmp.ne.s32.totalorder %s147, %s149
    %p153 = scmp.eq.s32.totalorder %s15, 0
    %p154 = por %p152, %p153
    %p155 = scmp.ne.s32.totalorder %s147, %s149
    %p156 = scmp.eq.s32.totalorder %s20, 1
    %p157 = por %p155, %p156
    %p158 = scmp.ne.s32.totalorder %s149, %s150
    %p159 = scmp.eq.s32.totalorder %s20, 0
    %p160 = por %p158, %p159
    %p161 = scmp.ne.s32.totalorder %s149, %s150
    %p162 = scmp.eq.s32.totalorder %s21, 1
    %p163 = por %p161, %p162
    %p165 = scmp.ne.s32.totalorder %s150, %s164
    %p166 = scmp.eq.s32.totalorder %s21, 0
    %p167 = por %p165, %p166
    %s169 = sadd.s32 %s168, 1
    %p172 = scmp.eq.s32.totalorder %s15, 1
    %p173 = scmp.ne.s32.totalorder %s168, %s170
    %p174 = scmp.eq.s32.totalorder %s15, 0
    %p175 = por %p173, %p174
    %p176 = scmp.ne.s32.totalorder %s168, %s170
    %p177 = scmp.eq.s32.totalorder %s20, 1
    %p178 = por %p176, %p177
    %p179 = scmp.ne.s32.totalorder %s170, %s171
    %p180 = scmp.eq.s32.totalorder %s20, 0
    %p181 = por %p179, %p180
    %p182 = scmp.ne.s32.totalorder %s170, %s171
    %p183 = scmp.eq.s32.totalorder %s21, 1
    %p184 = por %p182, %p183
    %p186 = scmp.ne.s32.totalorder %s171, %s185
    %p187 = scmp.eq.s32.totalorder %s21, 0
    %p188 = por %p186, %p187
    %s190 = sadd.s32 %s189, 1
    %p193 = scmp.eq.s32.totalorder %s15, 1
    %p194 = scmp.ne.s32.totalorder %s189, %s191
    %p195 = scmp.eq.s32.totalorder %s15, 0
    %p196 = por %p194, %p195
    %p197 = scmp.ne.s32.totalorder %s189, %s191
    %p198 = scmp.eq.s32.totalorder %s20, 1
    %p199 = por %p197, %p198
    %p200 = scmp.ne.s32.totalorder %s191, %s192
    %p201 = scmp.eq.s32.totalorder %s20, 0
    %p202 = por %p200, %p201
    %p203 = scmp.ne.s32.totalorder %s191, %s192
    %p204 = scmp.eq.s32.totalorder %s21, 1
    %p205 = por %p203, %p204
    %p207 = scmp.ne.s32.totalorder %s192, %s206
    %p208 = scmp.eq.s32.totalorder %s21, 0
    %p209 = por %p207, %p208
    %s211 = sadd.s32 %s210, 1
    %p214 = scmp.eq.s32.totalorder %s15, 1
    %p215 = scmp.ne.s32.totalorder %s210, %s212
    %p216 = scmp.eq.s32.totalorder %s15, 0
    %p217 = por %p215, %p216
    %p218 = scmp.ne.s32.totalorder %s210, %s212
    %p219 = scmp.eq.s32.totalorder %s20, 1
    %p220 = por %p218, %p219
    %p221 = scmp.ne.s32.totalorder %s212, %s213
    %p222 = scmp.eq.s32.totalorder %s20, 0
    %p223 = por %p221, %p222
    %p224 = scmp.ne.s32.totalorder %s212, %s213
    %p225 = scmp.eq.s32.totalorder %s21, 1
    %p226 = por %p224, %p225
    %p228 = scmp.ne.s32.totalorder %s213, %s227
    %p229 = scmp.eq.s32.totalorder %s21, 0
    %p230 = por %p228, %p229
    %s231 = ssub.s32 %s23, %s30
    %s232 = ssub.s32 %s22, %s34
    %s233 = sor.u32 %s231, %s232
    %p234 = scmp.eq.s32.totalorder %s233, 0
    %s236 = sadd.s32 %s235, 1
    %s237 = scalar_select %p234, %s235, %s236
    %p240 = pneg %p234
    %p241 = scmp.eq.s32.totalorder %s15, 1
    %p242 = por %p240, %p241
    %p243 = scmp.ne.s32.totalorder %s235, %s238
    %p244 = scmp.eq.s32.totalorder %s15, 0
    %p245 = por %p243, %p244
    %p246 = scmp.ne.s32.totalorder %s235, %s238
    %p247 = scmp.eq.s32.totalorder %s20, 1
    %p248 = por %p246, %p247
    %p249 = scmp.ne.s32.totalorder %s238, %s239
    %p250 = scmp.eq.s32.totalorder %s20, 0
    %p251 = por %p249, %p250
    %p252 = scmp.ne.s32.totalorder %s238, %s239
    %p253 = scmp.eq.s32.totalorder %s21, 1
    %p254 = por %p252, %p253
    %p256 = scmp.ne.s32.totalorder %s239, %s255
    %p257 = scmp.eq.s32.totalorder %s21, 0
    %p258 = por %p256, %p257
    %p259 = scmp.le.s32.totalorder 1, %s15
    %p260 = scmp.lt.s32.totalorder %s15, 3
    %p261 = pnand %p259, %p260
    %p262 = pneg %p261
    // Predicated region
    $region9: #{_pointgencon_impl.1} parent=5 // pred_check
      _
    $region10: #{_pointgencon_impl.1} parent=5 // pred_check_branch
      %264 = sbr.rel (%p261) target = $region12
    $region11: #{_pointgencon_impl.1} parent=5 // pred_region
      %s265 = ssub.s32 %s15, 1
      // Predicated region
      $region13: #{_pointgencon_impl.1} parent=11 // pred_check
        %p266 = pneg %p76
      $region14: #{_pointgencon_impl.1} parent=11 // pred_check_branch
        %268 = sbr.rel (%p266) target = $region16
      $region15: #{_pointgencon_impl.1} parent=11 // pred_region
        _
      $region16: #{_pointgencon_impl.1} parent=11 // pred_fallthru
        _
      // Predicated region
      $region17: #{_pointgencon_impl.1} parent=11 // pred_check
        %p269 = pneg %p97
      $region18: #{_pointgencon_impl.1} parent=11 // pred_check_branch
        %271 = sbr.rel (%p269) target = $region20
      $region19: #{_pointgencon_impl.1} parent=11 // pred_region
        _
      $region20: #{_pointgencon_impl.1} parent=11 // pred_fallthru
        _
      // Predicated region
      $region21: #{_pointgencon_impl.1} parent=11 // pred_check
        %p272 = pneg %p118
      $region22: #{_pointgencon_impl.1} parent=11 // pred_check_branch
        %274 = sbr.rel (%p272) target = $region24
      $region23: #{_pointgencon_impl.1} parent=11 // pred_region
        _
      $region24: #{_pointgencon_impl.1} parent=11 // pred_fallthru
        _
      // Predicated region
      $region25: #{_pointgencon_impl.1} parent=11 // pred_check
        %p275 = pneg %p139
      $region26: #{_pointgencon_impl.1} parent=11 // pred_check_branch
        %277 = sbr.rel (%p275) target = $region28
      $region27: #{_pointgencon_impl.1} parent=11 // pred_region
        _
      $region28: #{_pointgencon_impl.1} parent=11 // pred_fallthru
        _
      // Predicated region
      $region29: #{_pointgencon_impl.1} parent=11 // pred_check
        %p278 = pneg %p160
      $region30: #{_pointgencon_impl.1} parent=11 // pred_check_branch
        %280 = sbr.rel (%p278) target = $region32
      $region31: #{_pointgencon_impl.1} parent=11 // pred_region
        _
      $region32: #{_pointgencon_impl.1} parent=11 // pred_fallthru
        _
      // Predicated region
      $region33: #{_pointgencon_impl.1} parent=11 // pred_check
        %p281 = pneg %p181
      $region34: #{_pointgencon_impl.1} parent=11 // pred_check_branch
        %283 = sbr.rel (%p281) target = $region36
      $region35: #{_pointgencon_impl.1} parent=11 // pred_region
        _
      $region36: #{_pointgencon_impl.1} parent=11 // pred_fallthru
        _
      // Predicated region
      $region37: #{_pointgencon_impl.1} parent=11 // pred_check
        %p284 = pneg %p202
      $region38: #{_pointgencon_impl.1} parent=11 // pred_check_branch
        %286 = sbr.rel (%p284) target = $region40
      $region39: #{_pointgencon_impl.1} parent=11 // pred_region
        _
      $region40: #{_pointgencon_impl.1} parent=11 // pred_fallthru
        _
      // Predicated region
      $region41: #{_pointgencon_impl.1} parent=11 // pred_check
        %p287 = pneg %p223
      $region42: #{_pointgencon_impl.1} parent=11 // pred_check_branch
        %289 = sbr.rel (%p287) target = $region44
      $region43: #{_pointgencon_impl.1} parent=11 // pred_region
        _
      $region44: #{_pointgencon_impl.1} parent=11 // pred_fallthru
        _
    $region12: #{_pointgencon_impl.1} parent=5 // pred_fallthru
      _
    %p290 = scmp.lt.s32.totalorder %s15, 2
    // Predicated region
    $region45: #{_pointgencon_impl.1} parent=5 // pred_check
      %p291 = pneg %p290
    $region46: #{_pointgencon_impl.1} parent=5 // pred_check_branch
      %293 = sbr.rel (%p291) target = $region48
    $region47: #{_pointgencon_impl.1} parent=5 // pred_region
      // Predicated region
      $region49: #{_pointgencon_impl.1} parent=47 // pred_check
        %p294 = pneg %p49
      $region50: #{_pointgencon_impl.1} parent=47 // pred_check_branch
        %296 = sbr.rel (%p294) target = $region52
      $region51: #{_pointgencon_impl.1} parent=47 // pred_region
        %p297 = scmp.lt.s32.totalorder %s23, 1
        %s298 = scalar_select %p297, %s23, 1
        %p299 = scmp.lt.s32.totalorder %s22, 0
        %s300 = scalar_select %p299, %s22, 0
        %s301 = smul.addr %s298, 32
        %s302 = sadd.s32 %s300, %s301
        %s303 = smul.addr %s302, 8
        %s304 = scalar_lea.vmem %s0, %s303
      $region52: #{_pointgencon_impl.1} parent=47 // pred_fallthru
        _
    $region48: #{_pointgencon_impl.1} parent=5 // pred_fallthru
      _
    %p305 = scmp.le.s32.totalorder 1, %s15
    %p306 = scmp.lt.s32.totalorder %s15, 3
    %p307 = pnand %p305, %p306
    %p308 = pneg %p307
    // Predicated region
    $region53: #{_pointgencon_impl.1} parent=5 // pred_check
      _
    $region54: #{_pointgencon_impl.1} parent=5 // pred_check_branch
      %310 = sbr.rel (%p307) target = $region56
    $region55: #{_pointgencon_impl.1} parent=5 // pred_region
      %s311 = ssub.s32 %s15, 1
      %p312 = scmp.lt.s32.totalorder %s25, 1
      %s313 = scalar_select %p312, %s25, 1
      %p314 = scmp.lt.s32.totalorder %s24, 0
      %s315 = scalar_select %p314, %s24, 0
      %s316 = smul.addr %s313, 32
      %s317 = sadd.s32 %s315, %s316
      %s318 = smul.addr %s317, 8
      %s319 = scalar_lea.vmem %s0, %s318
      %p320 = pneg %p55
      %p321 = pneg %p52
      %p322 = pneg %p76
      %p323 = pneg %p73
      %p324 = pneg %p97
      %p325 = pneg %p94
      %p326 = pneg %p118
      %p327 = pneg %p115
      %p328 = pneg %p139
      %p329 = pneg %p136
      %p330 = pneg %p160
      %p331 = pneg %p157
      %p332 = pneg %p181
      %p333 = pneg %p178
      %p334 = pneg %p202
      %p335 = pneg %p199
      %p336 = pneg %p223
      %p337 = pneg %p220
      %p338 = pneg %p251
      %p339 = pneg %p248
      %p340 = scmp.lt.s32.totalorder %s25, 1
      %s341 = scalar_select %p340, %s25, 1
      %p342 = scmp.lt.s32.totalorder %s24, 0
      %s343 = scalar_select %p342, %s24, 0
      %s344 = sadd.s32 %s343, %s341
      %s345 = smul.addr %s344, 4
      %s346 = scalar_lea.vmem %s9, %s345
      %p347 = scmp.lt.s32.totalorder %s25, 1
      %s348 = scalar_select %p347, %s25, 1
      %p349 = scmp.lt.s32.totalorder %s24, 0
      %s350 = scalar_select %p349, %s24, 0
      %s351 = smul.addr %s348, 32
      %s352 = sadd.s32 %s350, %s351
      %s353 = smul.addr %s352, 8
      %s354 = scalar_lea.vmem %s0, %s353
      %p355 = scmp.lt.s32.totalorder %s25, 1
      %s356 = scalar_select %p355, %s25, 1
      %p357 = scmp.lt.s32.totalorder %s24, 0
      %s358 = scalar_select %p357, %s24, 0
      %s359 = sadd.s32 %s358, %s356
      %s360 = smul.addr %s359, 4
      %s361 = scalar_lea.vmem %s9, %s360
      %v363 = vld [vmem:[%s354] sm:$0xff]
      %v364 = vld [vmem:[%s354 + $0x8] sm:$0xff]
      %v365 = vld [vmem:[%s354 + $0x10] sm:$0xff]
      %v366 = vld [vmem:[%s354 + $0x18] sm:$0xff]
      %v367 = vld [vmem:[%s354 + $0x20] sm:$0xff]
      %v368 = vld [vmem:[%s354 + $0x28] sm:$0xff]
      %v369 = vld [vmem:[%s354 + $0x30] sm:$0xff]
      %v370 = vld [vmem:[%s354 + $0x38] sm:$0xff]
      %v371 = vld [vmem:[%s354 + $0x40] sm:$0xff]
      %v372 = vld [vmem:[%s354 + $0x48] sm:$0xff]
      %v373 = vld [vmem:[%s354 + $0x50] sm:$0xff]
      %v374 = vld [vmem:[%s354 + $0x58] sm:$0xff]
      %v375 = vld [vmem:[%s354 + $0x60] sm:$0xff]
      %v376 = vld [vmem:[%s354 + $0x68] sm:$0xff]
      %v377 = vld [vmem:[%s354 + $0x70] sm:$0xff]
      %v378 = vld [vmem:[%s354 + $0x78] sm:$0xff]
      %v379 = vld [vmem:[%s354 + $0x80] sm:$0xff]
      %v380 = vld [vmem:[%s354 + $0x88] sm:$0xff]
      %v381 = vld [vmem:[%s354 + $0x90] sm:$0xff]
      %v382 = vld [vmem:[%s354 + $0x98] sm:$0xff]
      %v383 = vld [vmem:[%s354 + $0xa0] sm:$0xff]
      %v384 = vld [vmem:[%s354 + $0xa8] sm:$0xff]
      %v385 = vld [vmem:[%s354 + $0xb0] sm:$0xff]
      %v386 = vld [vmem:[%s354 + $0xb8] sm:$0xff]
      %v387 = vld [vmem:[%s354 + $0xc0] sm:$0xff]
      %v388 = vld [vmem:[%s354 + $0xc8] sm:$0xff]
      %v389 = vld [vmem:[%s354 + $0xd0] sm:$0xff]
      %v390 = vld [vmem:[%s354 + $0xd8] sm:$0xff]
      %v391 = vld [vmem:[%s354 + $0xe0] sm:$0xff]
      %v392 = vld [vmem:[%s354 + $0xe8] sm:$0xff]
      %v393 = vld [vmem:[%s354 + $0xf0] sm:$0xff]
      %v394 = vld [vmem:[%s354 + $0xf8] sm:$0xff]
      %v395 = vpack.c.bf16 %v364, %v363
      %v396 = vpack.c.bf16 %v366, %v365
      %v397 = vpack.c.bf16 %v368, %v367
      %v398 = vpack.c.bf16 %v370, %v369
      %v399 = vpack.c.bf16 %v372, %v371
      %v400 = vpack.c.bf16 %v374, %v373
      %v401 = vpack.c.bf16 %v376, %v375
      %v402 = vpack.c.bf16 %v378, %v377
      %v403 = vpack.c.bf16 %v380, %v379
      %v404 = vpack.c.bf16 %v382, %v381
      %v405 = vpack.c.bf16 %v384, %v383
      %v406 = vpack.c.bf16 %v386, %v385
      %v407 = vpack.c.bf16 %v388, %v387
      %v408 = vpack.c.bf16 %v390, %v389
      %v409 = vpack.c.bf16 %v392, %v391
      %v410 = vpack.c.bf16 %v394, %v393
      %v411 = vld [vmem:[%s1] sm:$0xff]
      %v412 = vld [vmem:[%s1 + $0x8] sm:$0xff]
      %v413 = vld [vmem:[%s1 + $0x10] sm:$0xff]
      %v414 = vld [vmem:[%s1 + $0x18] sm:$0xff]
      %v415 = vld [vmem:[%s1 + $0x20] sm:$0xff]
      %v416 = vld [vmem:[%s1 + $0x28] sm:$0xff]
      %v417 = vld [vmem:[%s1 + $0x30] sm:$0xff]
      %v418 = vld [vmem:[%s1 + $0x38] sm:$0xff]
      %v419 = vld [vmem:[%s1 + $0x40] sm:$0xff]
      %v420 = vld [vmem:[%s1 + $0x48] sm:$0xff]
      %v421 = vld [vmem:[%s1 + $0x50] sm:$0xff]
      %v422 = vld [vmem:[%s1 + $0x58] sm:$0xff]
      %v423 = vld [vmem:[%s1 + $0x60] sm:$0xff]
      %v424 = vld [vmem:[%s1 + $0x68] sm:$0xff]
      %v425 = vld [vmem:[%s1 + $0x70] sm:$0xff]
      %v426 = vld [vmem:[%s1 + $0x78] sm:$0xff]
      %v427 = vld [vmem:[%s1 + $0x80] sm:$0xff]
      %v428 = vld [vmem:[%s1 + $0x88] sm:$0xff]
      %v429 = vld [vmem:[%s1 + $0x90] sm:$0xff]
      %v430 = vld [vmem:[%s1 + $0x98] sm:$0xff]
      %v431 = vld [vmem:[%s1 + $0xa0] sm:$0xff]
      %v432 = vld [vmem:[%s1 + $0xa8] sm:$0xff]
      %v433 = vld [vmem:[%s1 + $0xb0] sm:$0xff]
      %v434 = vld [vmem:[%s1 + $0xb8] sm:$0xff]
      %v435 = vld [vmem:[%s1 + $0xc0] sm:$0xff]
      %v436 = vld [vmem:[%s1 + $0xc8] sm:$0xff]
      %v437 = vld [vmem:[%s1 + $0xd0] sm:$0xff]
      %v438 = vld [vmem:[%s1 + $0xd8] sm:$0xff]
      %v439 = vld [vmem:[%s1 + $0xe0] sm:$0xff]
      %v440 = vld [vmem:[%s1 + $0xe8] sm:$0xff]
      %v441 = vld [vmem:[%s1 + $0xf0] sm:$0xff]
      %v442 = vld [vmem:[%s1 + $0xf8] sm:$0xff]
      %v443 = vld [vmem:[%s2] sm:$0xff]
      %v444 = vld [vmem:[%s2 + $0x8] sm:$0xff]
      %v445 = vld [vmem:[%s2 + $0x10] sm:$0xff]
      %v446 = vld [vmem:[%s2 + $0x18] sm:$0xff]
      %v447 = vld [vmem:[%s2 + $0x20] sm:$0xff]
      %v448 = vld [vmem:[%s2 + $0x28] sm:$0xff]
      %v449 = vld [vmem:[%s2 + $0x30] sm:$0xff]
      %v450 = vld [vmem:[%s2 + $0x38] sm:$0xff]
      %v451 = vld [vmem:[%s2 + $0x40] sm:$0xff]
      %v452 = vld [vmem:[%s2 + $0x48] sm:$0xff]
      %v453 = vld [vmem:[%s2 + $0x50] sm:$0xff]
      %v454 = vld [vmem:[%s2 + $0x58] sm:$0xff]
      %v455 = vld [vmem:[%s2 + $0x60] sm:$0xff]
      %v456 = vld [vmem:[%s2 + $0x68] sm:$0xff]
      %v457 = vld [vmem:[%s2 + $0x70] sm:$0xff]
      %v458 = vld [vmem:[%s2 + $0x78] sm:$0xff]
      %v459 = vld [vmem:[%s2 + $0x80] sm:$0xff]
      %v460 = vld [vmem:[%s2 + $0x88] sm:$0xff]
      %v461 = vld [vmem:[%s2 + $0x90] sm:$0xff]
      %v462 = vld [vmem:[%s2 + $0x98] sm:$0xff]
      %v463 = vld [vmem:[%s2 + $0xa0] sm:$0xff]
      %v464 = vld [vmem:[%s2 + $0xa8] sm:$0xff]
      %v465 = vld [vmem:[%s2 + $0xb0] sm:$0xff]
      %v466 = vld [vmem:[%s2 + $0xb8] sm:$0xff]
      %v467 = vld [vmem:[%s2 + $0xc0] sm:$0xff]
      %v468 = vld [vmem:[%s2 + $0xc8] sm:$0xff]
      %v469 = vld [vmem:[%s2 + $0xd0] sm:$0xff]
      %v470 = vld [vmem:[%s2 + $0xd8] sm:$0xff]
      %v471 = vld [vmem:[%s2 + $0xe0] sm:$0xff]
      %v472 = vld [vmem:[%s2 + $0xe8] sm:$0xff]
      %v473 = vld [vmem:[%s2 + $0xf0] sm:$0xff]
      %v474 = vld [vmem:[%s2 + $0xf8] sm:$0xff]
      %476 = vset.pattern.permute.xlu0 0
      %477 = vperm.xlu0 %476, %v443
      %v478 = vpop.permute.xlu0 %477
      %481 = vset.pattern.permute.xlu0 0
      %482 = vperm.xlu0 %481, %v444
      %v483 = vpop.permute.xlu0 %482
      %486 = vset.pattern.permute.xlu0 0
      %487 = vperm.xlu0 %486, %v445
      %v488 = vpop.permute.xlu0 %487
      %491 = vset.pattern.permute.xlu0 0
      %492 = vperm.xlu0 %491, %v446
      %v493 = vpop.permute.xlu0 %492
      %496 = vset.pattern.permute.xlu0 0
      %497 = vperm.xlu0 %496, %v447
      %v498 = vpop.permute.xlu0 %497
      %501 = vset.pattern.permute.xlu0 0
      %502 = vperm.xlu0 %501, %v448
      %v503 = vpop.permute.xlu0 %502
      %506 = vset.pattern.permute.xlu0 0
      %507 = vperm.xlu0 %506, %v449
      %v508 = vpop.permute.xlu0 %507
      %511 = vset.pattern.permute.xlu0 0
      %512 = vperm.xlu0 %511, %v450
      %v513 = vpop.permute.xlu0 %512
      %516 = vset.pattern.permute.xlu0 0
      %517 = vperm.xlu0 %516, %v451
      %v518 = vpop.permute.xlu0 %517
      %521 = vset.pattern.permute.xlu0 0
      %522 = vperm.xlu0 %521, %v452
      %v523 = vpop.permute.xlu0 %522
      %526 = vset.pattern.permute.xlu0 0
      %527 = vperm.xlu0 %526, %v453
      %v528 = vpop.permute.xlu0 %527
      %531 = vset.pattern.permute.xlu0 0
      %532 = vperm.xlu0 %531, %v454
      %v533 = vpop.permute.xlu0 %532
      %536 = vset.pattern.permute.xlu0 0
      %537 = vperm.xlu0 %536, %v455
      %v538 = vpop.permute.xlu0 %537
      %541 = vset.pattern.permute.xlu0 0
      %542 = vperm.xlu0 %541, %v456
      %v543 = vpop.permute.xlu0 %542
      %546 = vset.pattern.permute.xlu0 0
      %547 = vperm.xlu0 %546, %v457
      %v548 = vpop.permute.xlu0 %547
      %551 = vset.pattern.permute.xlu0 0
      %552 = vperm.xlu0 %551, %v458
      %v553 = vpop.permute.xlu0 %552
      %556 = vset.pattern.permute.xlu0 0
      %557 = vperm.xlu0 %556, %v459
      %v558 = vpop.permute.xlu0 %557
      %561 = vset.pattern.permute.xlu0 0
      %562 = vperm.xlu0 %561, %v460
      %v563 = vpop.permute.xlu0 %562
      %566 = vset.pattern.permute.xlu0 0
      %567 = vperm.xlu0 %566, %v461
      %v568 = vpop.permute.xlu0 %567
      %571 = vset.pattern.permute.xlu0 0
      %572 = vperm.xlu0 %571, %v462
      %v573 = vpop.permute.xlu0 %572
      %576 = vset.pattern.permute.xlu0 0
      %577 = vperm.xlu0 %576, %v463
      %v578 = vpop.permute.xlu0 %577
      %581 = vset.pattern.permute.xlu0 0
      %582 = vperm.xlu0 %581, %v464
      %v583 = vpop.permute.xlu0 %582
      %586 = vset.pattern.permute.xlu0 0
      %587 = vperm.xlu0 %586, %v465
      %v588 = vpop.permute.xlu0 %587
      %591 = vset.pattern.permute.xlu0 0
      %592 = vperm.xlu0 %591, %v466
      %v593 = vpop.permute.xlu0 %592
      %596 = vset.pattern.permute.xlu0 0
      %597 = vperm.xlu0 %596, %v467
      %v598 = vpop.permute.xlu0 %597
      %601 = vset.pattern.permute.xlu0 0
      %602 = vperm.xlu0 %601, %v468
      %v603 = vpop.permute.xlu0 %602
      %606 = vset.pattern.permute.xlu0 0
      %607 = vperm.xlu0 %606, %v469
      %v608 = vpop.permute.xlu0 %607
      %611 = vset.pattern.permute.xlu0 0
      %612 = vperm.xlu0 %611, %v470
      %v613 = vpop.permute.xlu0 %612
      %616 = vset.pattern.permute.xlu0 0
      %617 = vperm.xlu0 %616, %v471
      %v618 = vpop.permute.xlu0 %617
      %621 = vset.pattern.permute.xlu0 0
      %622 = vperm.xlu0 %621, %v472
      %v623 = vpop.permute.xlu0 %622
      %626 = vset.pattern.permute.xlu0 0
      %627 = vperm.xlu0 %626, %v473
      %v628 = vpop.permute.xlu0 %627
      %631 = vset.pattern.permute.xlu0 0
      %632 = vperm.xlu0 %631, %v474
      %v633 = vpop.permute.xlu0 %632
      %v667 = vunpack.c.l.b16 %v411
      %v668 = vunpack.c.h.b16 %v411
      %v669 = vunpack.c.l.b16 %v412
      %v670 = vunpack.c.h.b16 %v412
      %v671 = vunpack.c.l.b16 %v413
      %v672 = vunpack.c.h.b16 %v413
      %v673 = vunpack.c.l.b16 %v414
      %v674 = vunpack.c.h.b16 %v414
      %v675 = vunpack.c.l.b16 %v415
      %v676 = vunpack.c.h.b16 %v415
      %v677 = vunpack.c.l.b16 %v416
      %v678 = vunpack.c.h.b16 %v416
      %v679 = vunpack.c.l.b16 %v417
      %v680 = vunpack.c.h.b16 %v417
      %v681 = vunpack.c.l.b16 %v418
      %v682 = vunpack.c.h.b16 %v418
      %v683 = vunpack.c.l.b16 %v419
      %v684 = vunpack.c.h.b16 %v419
      %v685 = vunpack.c.l.b16 %v420
      %v686 = vunpack.c.h.b16 %v420
      %v687 = vunpack.c.l.b16 %v421
      %v688 = vunpack.c.h.b16 %v421
      %v689 = vunpack.c.l.b16 %v422
      %v690 = vunpack.c.h.b16 %v422
      %v691 = vunpack.c.l.b16 %v423
      %v692 = vunpack.c.h.b16 %v423
      %v693 = vunpack.c.l.b16 %v424
      %v694 = vunpack.c.h.b16 %v424
      %v695 = vunpack.c.l.b16 %v425
      %v696 = vunpack.c.h.b16 %v425
      %v697 = vunpack.c.l.b16 %v426
      %v698 = vunpack.c.h.b16 %v426
      %v699 = vunpack.c.l.b16 %v427
      %v700 = vunpack.c.h.b16 %v427
      %v701 = vunpack.c.l.b16 %v428
      %v702 = vunpack.c.h.b16 %v428
      %v703 = vunpack.c.l.b16 %v429
      %v704 = vunpack.c.h.b16 %v429
      %v705 = vunpack.c.l.b16 %v430
      %v706 = vunpack.c.h.b16 %v430
      %v707 = vunpack.c.l.b16 %v431
      %v708 = vunpack.c.h.b16 %v431
      %v709 = vunpack.c.l.b16 %v432
      %v710 = vunpack.c.h.b16 %v432
      %v711 = vunpack.c.l.b16 %v433
      %v712 = vunpack.c.h.b16 %v433
      %v713 = vunpack.c.l.b16 %v434
      %v714 = vunpack.c.h.b16 %v434
      %v715 = vunpack.c.l.b16 %v435
      %v716 = vunpack.c.h.b16 %v435
      %v717 = vunpack.c.l.b16 %v436
      %v718 = vunpack.c.h.b16 %v436
      %v719 = vunpack.c.l.b16 %v437
      %v720 = vunpack.c.h.b16 %v437
      %v721 = vunpack.c.l.b16 %v438
      %v722 = vunpack.c.h.b16 %v438
      %v723 = vunpack.c.l.b16 %v439
      %v724 = vunpack.c.h.b16 %v439
      %v725 = vunpack.c.l.b16 %v440
      %v726 = vunpack.c.h.b16 %v440
      %v727 = vunpack.c.l.b16 %v441
      %v728 = vunpack.c.h.b16 %v441
      %v729 = vunpack.c.l.b16 %v442
      %v730 = vunpack.c.h.b16 %v442
      %v731 = vpack.c.b16 %v669, %v667
      %v732 = vpack.c.b16 %v670, %v668
      %v733 = vpack.c.b16 %v673, %v671
      %v734 = vpack.c.b16 %v674, %v672
      %v735 = vpack.c.b16 %v677, %v675
      %v736 = vpack.c.b16 %v678, %v676
      %v737 = vpack.c.b16 %v681, %v679
      %v738 = vpack.c.b16 %v682, %v680
      %v739 = vpack.c.b16 %v685, %v683
      %v740 = vpack.c.b16 %v686, %v684
      %v741 = vpack.c.b16 %v689, %v687
      %v742 = vpack.c.b16 %v690, %v688
      %v743 = vpack.c.b16 %v693, %v691
      %v744 = vpack.c.b16 %v694, %v692
      %v745 = vpack.c.b16 %v697, %v695
      %v746 = vpack.c.b16 %v698, %v696
      %v747 = vpack.c.b16 %v701, %v699
      %v748 = vpack.c.b16 %v702, %v700
      %v749 = vpack.c.b16 %v705, %v703
      %v750 = vpack.c.b16 %v706, %v704
      %v751 = vpack.c.b16 %v709, %v707
      %v752 = vpack.c.b16 %v710, %v708
      %v753 = vpack.c.b16 %v713, %v711
      %v754 = vpack.c.b16 %v714, %v712
      %v755 = vpack.c.b16 %v717, %v715
      %v756 = vpack.c.b16 %v718, %v716
      %v757 = vpack.c.b16 %v721, %v719
      %v758 = vpack.c.b16 %v722, %v720
      %v759 = vpack.c.b16 %v725, %v723
      %v760 = vpack.c.b16 %v726, %v724
      %v761 = vpack.c.b16 %v729, %v727
      %v762 = vpack.c.b16 %v730, %v728
      %795 = vmatprep.subr.bf16.mxu0 0
      %796 = vmatpush1.bf16.msra.mxu0 %v402
      %797 = vmatprep.subr.bf16.mxu0 0
      %798 = vmatpush1.bf16.msra.mxu0 %v401
      %799 = vmatprep.subr.bf16.mxu0 0
      %800 = vmatpush1.bf16.msra.mxu0 %v400
      %801 = vmatprep.subr.bf16.mxu0 0
      %802 = vmatpush1.bf16.msra.mxu0 %v399
      %803 = vmatprep.subr.bf16.mxu0 0
      %804 = vmatpush1.bf16.msra.mxu0 %v398
      %805 = vmatprep.subr.bf16.mxu0 0
      %806 = vmatpush1.bf16.msra.mxu0 %v397
      %807 = vmatprep.subr.bf16.mxu0 0
      %808 = vmatpush1.bf16.msra.mxu0 %v396
      %809 = vmatprep.subr.bf16.mxu0 0
      %810 = vmatpush1.bf16.msra.mxu0 %v395
      %811 = vmatprep.subr.bf16.mxu0 0
      %812 = vmatpush2.bf16.msra.mxu0 %v410
      %813 = vmatprep.subr.bf16.mxu0 0
      %814 = vmatpush2.bf16.msra.mxu0 %v409
      %815 = vmatprep.subr.bf16.mxu0 0
      %816 = vmatpush2.bf16.msra.mxu0 %v408
      %817 = vmatprep.subr.bf16.mxu0 0
      %818 = vmatpush2.bf16.msra.mxu0 %v407
      %819 = vmatprep.subr.bf16.mxu0 0
      %820 = vmatpush2.bf16.msra.mxu0 %v406
      %821 = vmatprep.subr.bf16.mxu0 0
      %822 = vmatpush2.bf16.msra.mxu0 %v405
      %823 = vmatprep.subr.bf16.mxu0 0
      %824 = vmatpush2.bf16.msra.mxu0 %v404
      %825 = vmatprep.subr.bf16.mxu0 0
      %826 = vmatpush2.bf16.msra.mxu0 %v403
      %827 = vmatprep.mubr.bf16.mxu0 %v732
      %828 = vmatmul.mubr.bf16.gmra.mxu0 %v731
      %v829 = vpop.f32.mrf.mxu0
      %v830 = vadd.f32 %v478, %v829
      %v831 = vpop.f32.mrf.mxu0
      %v832 = vpop.f32.mrf.mxu0
      %v833 = vadd.f32 %v483, %v832
      %v834 = vpop.f32.mrf.mxu0
      %835 = vmatprep.mubr.bf16.mxu0 %v734
      %836 = vmatmul.mubr.bf16.gmra.mxu0 %v733
      %v837 = vpop.f32.mrf.mxu0
      %v838 = vadd.f32 %v488, %v837
      %v839 = vpop.f32.mrf.mxu0
      %v840 = vpop.f32.mrf.mxu0
      %v841 = vadd.f32 %v493, %v840
      %v842 = vpop.f32.mrf.mxu0
      %843 = vmatprep.mubr.bf16.mxu0 %v736
      %844 = vmatmul.mubr.bf16.gmra.mxu0 %v735
      %v845 = vpop.f32.mrf.mxu0
      %v846 = vadd.f32 %v498, %v845
      %v847 = vpop.f32.mrf.mxu0
      %v848 = vpop.f32.mrf.mxu0
      %v849 = vadd.f32 %v503, %v848
      %v850 = vpop.f32.mrf.mxu0
      %851 = vmatprep.mubr.bf16.mxu0 %v738
      %852 = vmatmul.mubr.bf16.gmra.mxu0 %v737
      %v853 = vpop.f32.mrf.mxu0
      %v854 = vadd.f32 %v508, %v853
      %v855 = vpop.f32.mrf.mxu0
      %v856 = vpop.f32.mrf.mxu0
      %v857 = vadd.f32 %v513, %v856
      %v858 = vpop.f32.mrf.mxu0
      %859 = vmatprep.mubr.bf16.mxu0 %v740
      %860 = vmatmul.mubr.bf16.gmra.mxu0 %v739
      %v861 = vpop.f32.mrf.mxu0
      %v862 = vadd.f32 %v518, %v861
      %v863 = vpop.f32.mrf.mxu0
      %v864 = vpop.f32.mrf.mxu0
      %v865 = vadd.f32 %v523, %v864
      %v866 = vpop.f32.mrf.mxu0
      %867 = vmatprep.mubr.bf16.mxu0 %v742
      %868 = vmatmul.mubr.bf16.gmra.mxu0 %v741
      %v869 = vpop.f32.mrf.mxu0
      %v870 = vadd.f32 %v528, %v869
      %v871 = vpop.f32.mrf.mxu0
      %v872 = vpop.f32.mrf.mxu0
      %v873 = vadd.f32 %v533, %v872
      %v874 = vpop.f32.mrf.mxu0
      %875 = vmatprep.mubr.bf16.mxu0 %v744
      %876 = vmatmul.mubr.bf16.gmra.mxu0 %v743
      %v877 = vpop.f32.mrf.mxu0
      %v878 = vadd.f32 %v538, %v877
      %v879 = vpop.f32.mrf.mxu0
      %v880 = vpop.f32.mrf.mxu0
      %v881 = vadd.f32 %v543, %v880
      %v882 = vpop.f32.mrf.mxu0
      %883 = vmatprep.mubr.bf16.mxu0 %v746
      %884 = vmatmul.mubr.bf16.gmra.mxu0 %v745
      %v885 = vpop.f32.mrf.mxu0
      %v886 = vadd.f32 %v548, %v885
      %v887 = vpop.f32.mrf.mxu0
      %v888 = vpop.f32.mrf.mxu0
      %v889 = vadd.f32 %v553, %v888
      %v890 = vpop.f32.mrf.mxu0
      %891 = vmatprep.mubr.bf16.mxu0 %v748
      %892 = vmatmul.mubr.bf16.gmra.mxu0 %v747
      %v893 = vpop.f32.mrf.mxu0
      %v894 = vadd.f32 %v558, %v893
      %v895 = vpop.f32.mrf.mxu0
      %v896 = vpop.f32.mrf.mxu0
      %v897 = vadd.f32 %v563, %v896
      %v898 = vpop.f32.mrf.mxu0
      %899 = vmatprep.mubr.bf16.mxu0 %v750
      %900 = vmatmul.mubr.bf16.gmra.mxu0 %v749
      %v901 = vpop.f32.mrf.mxu0
      %v902 = vadd.f32 %v568, %v901
      %v903 = vpop.f32.mrf.mxu0
      %v904 = vpop.f32.mrf.mxu0
      %v905 = vadd.f32 %v573, %v904
      %v906 = vpop.f32.mrf.mxu0
      %907 = vmatprep.mubr.bf16.mxu0 %v752
      %908 = vmatmul.mubr.bf16.gmra.mxu0 %v751
      %v909 = vpop.f32.mrf.mxu0
      %v910 = vadd.f32 %v578, %v909
      %v911 = vpop.f32.mrf.mxu0
      %v912 = vpop.f32.mrf.mxu0
      %v913 = vadd.f32 %v583, %v912
      %v914 = vpop.f32.mrf.mxu0
      %915 = vmatprep.mubr.bf16.mxu0 %v754
      %916 = vmatmul.mubr.bf16.gmra.mxu0 %v753
      %v917 = vpop.f32.mrf.mxu0
      %v918 = vadd.f32 %v588, %v917
      %v919 = vpop.f32.mrf.mxu0
      %v920 = vpop.f32.mrf.mxu0
      %v921 = vadd.f32 %v593, %v920
      %v922 = vpop.f32.mrf.mxu0
      %923 = vmatprep.mubr.bf16.mxu0 %v756
      %924 = vmatmul.mubr.bf16.gmra.mxu0 %v755
      %v925 = vpop.f32.mrf.mxu0
      %v926 = vadd.f32 %v598, %v925
      %v927 = vpop.f32.mrf.mxu0
      %v928 = vpop.f32.mrf.mxu0
      %v929 = vadd.f32 %v603, %v928
      %v930 = vpop.f32.mrf.mxu0
      %931 = vmatprep.mubr.bf16.mxu0 %v758
      %932 = vmatmul.mubr.bf16.gmra.mxu0 %v757
      %v933 = vpop.f32.mrf.mxu0
      %v934 = vadd.f32 %v608, %v933
      %v935 = vpop.f32.mrf.mxu0
      %v936 = vpop.f32.mrf.mxu0
      %v937 = vadd.f32 %v613, %v936
      %v938 = vpop.f32.mrf.mxu0
      %939 = vmatprep.mubr.bf16.mxu0 %v760
      %940 = vmatmul.mubr.bf16.gmra.mxu0 %v759
      %v941 = vpop.f32.mrf.mxu0
      %v942 = vadd.f32 %v618, %v941
      %v943 = vpop.f32.mrf.mxu0
      %v944 = vpop.f32.mrf.mxu0
      %v945 = vadd.f32 %v623, %v944
      %v946 = vpop.f32.mrf.mxu0
      %947 = vmatprep.mubr.bf16.mxu0 %v762
      %948 = vmatmul.mubr.bf16.gmra.mxu0 %v761
      %v949 = vpop.f32.mrf.mxu0
      %v950 = vadd.f32 %v628, %v949
      %v951 = vpop.f32.mrf.mxu0
      %v952 = vpop.f32.mrf.mxu0
      %v953 = vadd.f32 %v633, %v952
      %v954 = vpop.f32.mrf.mxu0
      %955 = vdwg.mxu0
      %v956 = vmax.f32 %v830, 0.0
      %v957 = vmax.f32 %v833, 0.0
      %v958 = vmax.f32 %v838, 0.0
      %v959 = vmax.f32 %v841, 0.0
      %v960 = vmax.f32 %v846, 0.0
      %v961 = vmax.f32 %v849, 0.0
      %v962 = vmax.f32 %v854, 0.0
      %v963 = vmax.f32 %v857, 0.0
      %v964 = vmax.f32 %v862, 0.0
      %v965 = vmax.f32 %v865, 0.0
      %v966 = vmax.f32 %v870, 0.0
      %v967 = vmax.f32 %v873, 0.0
      %v968 = vmax.f32 %v878, 0.0
      %v969 = vmax.f32 %v881, 0.0
      %v970 = vmax.f32 %v886, 0.0
      %v971 = vmax.f32 %v889, 0.0
      %v972 = vmax.f32 %v894, 0.0
      %v973 = vmax.f32 %v897, 0.0
      %v974 = vmax.f32 %v902, 0.0
      %v975 = vmax.f32 %v905, 0.0
      %v976 = vmax.f32 %v910, 0.0
      %v977 = vmax.f32 %v913, 0.0
      %v978 = vmax.f32 %v918, 0.0
      %v979 = vmax.f32 %v921, 0.0
      %v980 = vmax.f32 %v926, 0.0
      %v981 = vmax.f32 %v929, 0.0
      %v982 = vmax.f32 %v934, 0.0
      %v983 = vmax.f32 %v937, 0.0
      %v984 = vmax.f32 %v942, 0.0
      %v985 = vmax.f32 %v945, 0.0
      %v986 = vmax.f32 %v950, 0.0
      %v987 = vmax.f32 %v953, 0.0
      %v988 = vpack.c.bf16 %v957, %v956
      %v989 = vpack.c.bf16 %v959, %v958
      %v990 = vpack.c.bf16 %v961, %v960
      %v991 = vpack.c.bf16 %v963, %v962
      %v992 = vpack.c.bf16 %v965, %v964
      %v993 = vpack.c.bf16 %v967, %v966
      %v994 = vpack.c.bf16 %v969, %v968
      %v995 = vpack.c.bf16 %v971, %v970
      %v996 = vpack.c.bf16 %v973, %v972
      %v997 = vpack.c.bf16 %v975, %v974
      %v998 = vpack.c.bf16 %v977, %v976
      %v999 = vpack.c.bf16 %v979, %v978
      %v1000 = vpack.c.bf16 %v981, %v980
      %v1001 = vpack.c.bf16 %v983, %v982
      %v1002 = vpack.c.bf16 %v985, %v984
      %v1003 = vpack.c.bf16 %v987, %v986
      %v1004 = vld [vmem:[%s3] sm:$0xff]
      %v1005 = vld [vmem:[%s3 + $0x8] sm:$0xff]
      %v1006 = vld [vmem:[%s3 + $0x10] sm:$0xff]
      %v1007 = vld [vmem:[%s3 + $0x18] sm:$0xff]
      %v1008 = vld [vmem:[%s3 + $0x20] sm:$0xff]
      %v1009 = vld [vmem:[%s3 + $0x28] sm:$0xff]
      %v1010 = vld [vmem:[%s3 + $0x30] sm:$0xff]
      %v1011 = vld [vmem:[%s3 + $0x38] sm:$0xff]
      %v1012 = vld [vmem:[%s3 + $0x40] sm:$0xff]
      %v1013 = vld [vmem:[%s3 + $0x48] sm:$0xff]
      %v1014 = vld [vmem:[%s3 + $0x50] sm:$0xff]
      %v1015 = vld [vmem:[%s3 + $0x58] sm:$0xff]
      %v1016 = vld [vmem:[%s3 + $0x60] sm:$0xff]
      %v1017 = vld [vmem:[%s3 + $0x68] sm:$0xff]
      %v1018 = vld [vmem:[%s3 + $0x70] sm:$0xff]
      %v1019 = vld [vmem:[%s3 + $0x78] sm:$0xff]
      %v1020 = vld [vmem:[%s4] sm:$0xff]
      %v1021 = vld [vmem:[%s4 + $0x8] sm:$0xff]
      %v1022 = vld [vmem:[%s4 + $0x10] sm:$0xff]
      %v1023 = vld [vmem:[%s4 + $0x18] sm:$0xff]
      %v1024 = vld [vmem:[%s4 + $0x20] sm:$0xff]
      %v1025 = vld [vmem:[%s4 + $0x28] sm:$0xff]
      %v1026 = vld [vmem:[%s4 + $0x30] sm:$0xff]
      %v1027 = vld [vmem:[%s4 + $0x38] sm:$0xff]
      %v1028 = vld [vmem:[%s4 + $0x40] sm:$0xff]
      %v1029 = vld [vmem:[%s4 + $0x48] sm:$0xff]
      %v1030 = vld [vmem:[%s4 + $0x50] sm:$0xff]
      %v1031 = vld [vmem:[%s4 + $0x58] sm:$0xff]
      %v1032 = vld [vmem:[%s4 + $0x60] sm:$0xff]
      %v1033 = vld [vmem:[%s4 + $0x68] sm:$0xff]
      %v1034 = vld [vmem:[%s4 + $0x70] sm:$0xff]
      %v1035 = vld [vmem:[%s4 + $0x78] sm:$0xff]
      %1037 = vset.pattern.permute.xlu0 0
      %1038 = vperm.xlu0 %1037, %v1020
      %v1039 = vpop.permute.xlu0 %1038
      %1042 = vset.pattern.permute.xlu0 0
      %1043 = vperm.xlu0 %1042, %v1021
      %v1044 = vpop.permute.xlu0 %1043
      %1047 = vset.pattern.permute.xlu0 0
      %1048 = vperm.xlu0 %1047, %v1022
      %v1049 = vpop.permute.xlu0 %1048
      %1052 = vset.pattern.permute.xlu0 0
      %1053 = vperm.xlu0 %1052, %v1023
      %v1054 = vpop.permute.xlu0 %1053
      %1057 = vset.pattern.permute.xlu0 0
      %1058 = vperm.xlu0 %1057, %v1024
      %v1059 = vpop.permute.xlu0 %1058
      %1062 = vset.pattern.permute.xlu0 0
      %1063 = vperm.xlu0 %1062, %v1025
      %v1064 = vpop.permute.xlu0 %1063
      %1067 = vset.pattern.permute.xlu0 0
      %1068 = vperm.xlu0 %1067, %v1026
      %v1069 = vpop.permute.xlu0 %1068
      %1072 = vset.pattern.permute.xlu0 0
      %1073 = vperm.xlu0 %1072, %v1027
      %v1074 = vpop.permute.xlu0 %1073
      %1077 = vset.pattern.permute.xlu0 0
      %1078 = vperm.xlu0 %1077, %v1028
      %v1079 = vpop.permute.xlu0 %1078
      %1082 = vset.pattern.permute.xlu0 0
      %1083 = vperm.xlu0 %1082, %v1029
      %v1084 = vpop.permute.xlu0 %1083
      %1087 = vset.pattern.permute.xlu0 0
      %1088 = vperm.xlu0 %1087, %v1030
      %v1089 = vpop.permute.xlu0 %1088
      %1092 = vset.pattern.permute.xlu0 0
      %1093 = vperm.xlu0 %1092, %v1031
      %v1094 = vpop.permute.xlu0 %1093
      %1097 = vset.pattern.permute.xlu0 0
      %1098 = vperm.xlu0 %1097, %v1032
      %v1099 = vpop.permute.xlu0 %1098
      %1102 = vset.pattern.permute.xlu0 0
      %1103 = vperm.xlu0 %1102, %v1033
      %v1104 = vpop.permute.xlu0 %1103
      %1107 = vset.pattern.permute.xlu0 0
      %1108 = vperm.xlu0 %1107, %v1034
      %v1109 = vpop.permute.xlu0 %1108
      %1112 = vset.pattern.permute.xlu0 0
      %1113 = vperm.xlu0 %1112, %v1035
      %v1114 = vpop.permute.xlu0 %1113
      %v1132 = vunpack.c.l.b16 %v1004
      %v1133 = vunpack.c.h.b16 %v1004
      %v1134 = vunpack.c.l.b16 %v1005
      %v1135 = vunpack.c.h.b16 %v1005
      %v1136 = vunpack.c.l.b16 %v1006
      %v1137 = vunpack.c.h.b16 %v1006
      %v1138 = vunpack.c.l.b16 %v1007
      %v1139 = vunpack.c.h.b16 %v1007
      %v1140 = vunpack.c.l.b16 %v1008
      %v1141 = vunpack.c.h.b16 %v1008
      %v1142 = vunpack.c.l.b16 %v1009
      %v1143 = vunpack.c.h.b16 %v1009
      %v1144 = vunpack.c.l.b16 %v1010
      %v1145 = vunpack.c.h.b16 %v1010
      %v1146 = vunpack.c.l.b16 %v1011
      %v1147 = vunpack.c.h.b16 %v1011
      %v1148 = vunpack.c.l.b16 %v1012
      %v1149 = vunpack.c.h.b16 %v1012
      %v1150 = vunpack.c.l.b16 %v1013
      %v1151 = vunpack.c.h.b16 %v1013
      %v1152 = vunpack.c.l.b16 %v1014
      %v1153 = vunpack.c.h.b16 %v1014
      %v1154 = vunpack.c.l.b16 %v1015
      %v1155 = vunpack.c.h.b16 %v1015
      %v1156 = vunpack.c.l.b16 %v1016
      %v1157 = vunpack.c.h.b16 %v1016
      %v1158 = vunpack.c.l.b16 %v1017
      %v1159 = vunpack.c.h.b16 %v1017
      %v1160 = vunpack.c.l.b16 %v1018
      %v1161 = vunpack.c.h.b16 %v1018
      %v1162 = vunpack.c.l.b16 %v1019
      %v1163 = vunpack.c.h.b16 %v1019
      %v1164 = vpack.c.b16 %v1134, %v1132
      %v1165 = vpack.c.b16 %v1135, %v1133
      %v1166 = vpack.c.b16 %v1138, %v1136
      %v1167 = vpack.c.b16 %v1139, %v1137
      %v1168 = vpack.c.b16 %v1142, %v1140
      %v1169 = vpack.c.b16 %v1143, %v1141
      %v1170 = vpack.c.b16 %v1146, %v1144
      %v1171 = vpack.c.b16 %v1147, %v1145
      %v1172 = vpack.c.b16 %v1150, %v1148
      %v1173 = vpack.c.b16 %v1151, %v1149
      %v1174 = vpack.c.b16 %v1154, %v1152
      %v1175 = vpack.c.b16 %v1155, %v1153
      %v1176 = vpack.c.b16 %v1158, %v1156
      %v1177 = vpack.c.b16 %v1159, %v1157
      %v1178 = vpack.c.b16 %v1162, %v1160
      %v1179 = vpack.c.b16 %v1163, %v1161
      %1196 = vmatprep.subr.bf16.mxu0 0
      %1197 = vmatpush1.bf16.msra.mxu0 %v995
      %1198 = vmatprep.subr.bf16.mxu0 0
      %1199 = vmatpush1.bf16.msra.mxu0 %v994
      %1200 = vmatprep.subr.bf16.mxu0 0
      %1201 = vmatpush1.bf16.msra.mxu0 %v993
      %1202 = vmatprep.subr.bf16.mxu0 0
      %1203 = vmatpush1.bf16.msra.mxu0 %v992
      %1204 = vmatprep.subr.bf16.mxu0 0
      %1205 = vmatpush1.bf16.msra.mxu0 %v991
      %1206 = vmatprep.subr.bf16.mxu0 0
      %1207 = vmatpush1.bf16.msra.mxu0 %v990
      %1208 = vmatprep.subr.bf16.mxu0 0
      %1209 = vmatpush1.bf16.msra.mxu0 %v989
      %1210 = vmatprep.subr.bf16.mxu0 0
      %1211 = vmatpush1.bf16.msra.mxu0 %v988
      %1212 = vmatprep.subr.bf16.mxu0 0
      %1213 = vmatpush2.bf16.msra.mxu0 %v1003
      %1214 = vmatprep.subr.bf16.mxu0 0
      %1215 = vmatpush2.bf16.msra.mxu0 %v1002
      %1216 = vmatprep.subr.bf16.mxu0 0
      %1217 = vmatpush2.bf16.msra.mxu0 %v1001
      %1218 = vmatprep.subr.bf16.mxu0 0
      %1219 = vmatpush2.bf16.msra.mxu0 %v1000
      %1220 = vmatprep.subr.bf16.mxu0 0
      %1221 = vmatpush2.bf16.msra.mxu0 %v999
      %1222 = vmatprep.subr.bf16.mxu0 0
      %1223 = vmatpush2.bf16.msra.mxu0 %v998
      %1224 = vmatprep.subr.bf16.mxu0 0
      %1225 = vmatpush2.bf16.msra.mxu0 %v997
      %1226 = vmatprep.subr.bf16.mxu0 0
      %1227 = vmatpush2.bf16.msra.mxu0 %v996
      %1228 = vmatprep.mubr.bf16.mxu0 %v1165
      %1229 = vmatmul.mubr.bf16.gmra.mxu0 %v1164
      %v1230 = vpop.f32.mrf.mxu0
      %v1231 = vadd.f32 %v1039, %v1230
      %v1232 = vpop.f32.mrf.mxu0
      %v1233 = vpop.f32.mrf.mxu0
      %v1234 = vadd.f32 %v1044, %v1233
      %v1235 = vpop.f32.mrf.mxu0
      %1236 = vmatprep.mubr.bf16.mxu0 %v1167
      %1237 = vmatmul.mubr.bf16.gmra.mxu0 %v1166
      %v1238 = vpop.f32.mrf.mxu0
      %v1239 = vadd.f32 %v1049, %v1238
      %v1240 = vpop.f32.mrf.mxu0
      %v1241 = vpop.f32.mrf.mxu0
      %v1242 = vadd.f32 %v1054, %v1241
      %v1243 = vpop.f32.mrf.mxu0
      %1244 = vmatprep.mubr.bf16.mxu0 %v1169
      %1245 = vmatmul.mubr.bf16.gmra.mxu0 %v1168
      %v1246 = vpop.f32.mrf.mxu0
      %v1247 = vadd.f32 %v1059, %v1246
      %v1248 = vpop.f32.mrf.mxu0
      %v1249 = vpop.f32.mrf.mxu0
      %v1250 = vadd.f32 %v1064, %v1249
      %v1251 = vpop.f32.mrf.mxu0
      %1252 = vmatprep.mubr.bf16.mxu0 %v1171
      %1253 = vmatmul.mubr.bf16.gmra.mxu0 %v1170
      %v1254 = vpop.f32.mrf.mxu0
      %v1255 = vadd.f32 %v1069, %v1254
      %v1256 = vpop.f32.mrf.mxu0
      %v1257 = vpop.f32.mrf.mxu0
      %v1258 = vadd.f32 %v1074, %v1257
      %v1259 = vpop.f32.mrf.mxu0
      %1260 = vmatprep.mubr.bf16.mxu0 %v1173
      %1261 = vmatmul.mubr.bf16.gmra.mxu0 %v1172
      %v1262 = vpop.f32.mrf.mxu0
      %v1263 = vadd.f32 %v1079, %v1262
      %v1264 = vpop.f32.mrf.mxu0
      %v1265 = vpop.f32.mrf.mxu0
      %v1266 = vadd.f32 %v1084, %v1265
      %v1267 = vpop.f32.mrf.mxu0
      %1268 = vmatprep.mubr.bf16.mxu0 %v1175
      %1269 = vmatmul.mubr.bf16.gmra.mxu0 %v1174
      %v1270 = vpop.f32.mrf.mxu0
      %v1271 = vadd.f32 %v1089, %v1270
      %v1272 = vpop.f32.mrf.mxu0
      %v1273 = vpop.f32.mrf.mxu0
      %v1274 = vadd.f32 %v1094, %v1273
      %v1275 = vpop.f32.mrf.mxu0
      %1276 = vmatprep.mubr.bf16.mxu0 %v1177
      %1277 = vmatmul.mubr.bf16.gmra.mxu0 %v1176
      %v1278 = vpop.f32.mrf.mxu0
      %v1279 = vadd.f32 %v1099, %v1278
      %v1280 = vpop.f32.mrf.mxu0
      %v1281 = vpop.f32.mrf.mxu0
      %v1282 = vadd.f32 %v1104, %v1281
      %v1283 = vpop.f32.mrf.mxu0
      %1284 = vmatprep.mubr.bf16.mxu0 %v1179
      %1285 = vmatmul.mubr.bf16.gmra.mxu0 %v1178
      %v1286 = vpop.f32.mrf.mxu0
      %v1287 = vadd.f32 %v1109, %v1286
      %v1288 = vpop.f32.mrf.mxu0
      %v1289 = vpop.f32.mrf.mxu0
      %v1290 = vadd.f32 %v1114, %v1289
      %v1291 = vpop.f32.mrf.mxu0
      %1292 = vdwg.mxu0
      %v1293 = vmax.f32 %v1231, 0.0
      %v1294 = vmax.f32 %v1234, 0.0
      %v1295 = vmax.f32 %v1239, 0.0
      %v1296 = vmax.f32 %v1242, 0.0
      %v1297 = vmax.f32 %v1247, 0.0
      %v1298 = vmax.f32 %v1250, 0.0
      %v1299 = vmax.f32 %v1255, 0.0
      %v1300 = vmax.f32 %v1258, 0.0
      %v1301 = vmax.f32 %v1263, 0.0
      %v1302 = vmax.f32 %v1266, 0.0
      %v1303 = vmax.f32 %v1271, 0.0
      %v1304 = vmax.f32 %v1274, 0.0
      %v1305 = vmax.f32 %v1279, 0.0
      %v1306 = vmax.f32 %v1282, 0.0
      %v1307 = vmax.f32 %v1287, 0.0
      %v1308 = vmax.f32 %v1290, 0.0
      %v1309 = vpack.c.bf16 %v1294, %v1293
      %v1310 = vpack.c.bf16 %v1296, %v1295
      %v1311 = vpack.c.bf16 %v1298, %v1297
      %v1312 = vpack.c.bf16 %v1300, %v1299
      %v1313 = vpack.c.bf16 %v1302, %v1301
      %v1314 = vpack.c.bf16 %v1304, %v1303
      %v1315 = vpack.c.bf16 %v1306, %v1305
      %v1316 = vpack.c.bf16 %v1308, %v1307
      %v1317 = vld [vmem:[%s5] sm:$0xf]
      %v1318 = vld [vmem:[%s5 + $0x4] sm:$0xf]
      %v1319 = vld [vmem:[%s5 + $0x8] sm:$0xf]
      %v1320 = vld [vmem:[%s5 + $0xc] sm:$0xf]
      %v1321 = vld [vmem:[%s5 + $0x10] sm:$0xf]
      %v1322 = vld [vmem:[%s5 + $0x14] sm:$0xf]
      %v1323 = vld [vmem:[%s5 + $0x18] sm:$0xf]
      %v1324 = vld [vmem:[%s5 + $0x1c] sm:$0xf]
      %v1325 = vld [vmem:[%s5 + $0x20] sm:$0xf]
      %v1326 = vld [vmem:[%s5 + $0x24] sm:$0xf]
      %v1327 = vld [vmem:[%s5 + $0x28] sm:$0xf]
      %v1328 = vld [vmem:[%s5 + $0x2c] sm:$0xf]
      %v1329 = vld [vmem:[%s5 + $0x30] sm:$0xf]
      %v1330 = vld [vmem:[%s5 + $0x34] sm:$0xf]
      %v1331 = vld [vmem:[%s5 + $0x38] sm:$0xf]
      %v1332 = vld [vmem:[%s5 + $0x3c] sm:$0xf]
      %v1333 = vld [vmem:[%s6] sm:$0xff]
      %v1334 = vld [vmem:[%s6 + $0x8] sm:$0xff]
      %v1335 = vld [vmem:[%s6 + $0x10] sm:$0xff]
      %v1336 = vld [vmem:[%s6 + $0x18] sm:$0xff]
      %v1337 = vld [vmem:[%s6 + $0x20] sm:$0xff]
      %v1338 = vld [vmem:[%s6 + $0x28] sm:$0xff]
      %v1339 = vld [vmem:[%s6 + $0x30] sm:$0xff]
      %v1340 = vld [vmem:[%s6 + $0x38] sm:$0xff]
      %v1341 = vld [vmem:[%s6 + $0x40] sm:$0xff]
      %v1342 = vld [vmem:[%s6 + $0x48] sm:$0xff]
      %v1343 = vld [vmem:[%s6 + $0x50] sm:$0xff]
      %v1344 = vld [vmem:[%s6 + $0x58] sm:$0xff]
      %v1345 = vld [vmem:[%s6 + $0x60] sm:$0xff]
      %v1346 = vld [vmem:[%s6 + $0x68] sm:$0xff]
      %v1347 = vld [vmem:[%s6 + $0x70] sm:$0xff]
      %v1348 = vld [vmem:[%s6 + $0x78] sm:$0xff]
      %1350 = vset.pattern.permute.xlu0 0
      %1351 = vperm.xlu0 %1350, %v1333
      %v1352 = vpop.permute.xlu0 %1351
      %1355 = vset.pattern.permute.xlu0 0
      %1356 = vperm.xlu0 %1355, %v1334
      %v1357 = vpop.permute.xlu0 %1356
      %1360 = vset.pattern.permute.xlu0 0
      %1361 = vperm.xlu0 %1360, %v1335
      %v1362 = vpop.permute.xlu0 %1361
      %1365 = vset.pattern.permute.xlu0 0
      %1366 = vperm.xlu0 %1365, %v1336
      %v1367 = vpop.permute.xlu0 %1366
      %1370 = vset.pattern.permute.xlu0 0
      %1371 = vperm.xlu0 %1370, %v1337
      %v1372 = vpop.permute.xlu0 %1371
      %1375 = vset.pattern.permute.xlu0 0
      %1376 = vperm.xlu0 %1375, %v1338
      %v1377 = vpop.permute.xlu0 %1376
      %1380 = vset.pattern.permute.xlu0 0
      %1381 = vperm.xlu0 %1380, %v1339
      %v1382 = vpop.permute.xlu0 %1381
      %1385 = vset.pattern.permute.xlu0 0
      %1386 = vperm.xlu0 %1385, %v1340
      %v1387 = vpop.permute.xlu0 %1386
      %1390 = vset.pattern.permute.xlu0 0
      %1391 = vperm.xlu0 %1390, %v1341
      %v1392 = vpop.permute.xlu0 %1391
      %1395 = vset.pattern.permute.xlu0 0
      %1396 = vperm.xlu0 %1395, %v1342
      %v1397 = vpop.permute.xlu0 %1396
      %1400 = vset.pattern.permute.xlu0 0
      %1401 = vperm.xlu0 %1400, %v1343
      %v1402 = vpop.permute.xlu0 %1401
      %1405 = vset.pattern.permute.xlu0 0
      %1406 = vperm.xlu0 %1405, %v1344
      %v1407 = vpop.permute.xlu0 %1406
      %1410 = vset.pattern.permute.xlu0 0
      %1411 = vperm.xlu0 %1410, %v1345
      %v1412 = vpop.permute.xlu0 %1411
      %1415 = vset.pattern.permute.xlu0 0
      %1416 = vperm.xlu0 %1415, %v1346
      %v1417 = vpop.permute.xlu0 %1416
      %1420 = vset.pattern.permute.xlu0 0
      %1421 = vperm.xlu0 %1420, %v1347
      %v1422 = vpop.permute.xlu0 %1421
      %1425 = vset.pattern.permute.xlu0 0
      %1426 = vperm.xlu0 %1425, %v1348
      %v1427 = vpop.permute.xlu0 %1426
      %v1445 = vunpack.c.l.b16 %v1317
      %v1446 = vunpack.c.l.b16 %v1318
      %v1447 = vunpack.c.l.b16 %v1319
      %v1448 = vunpack.c.l.b16 %v1320
      %v1449 = vunpack.c.l.b16 %v1321
      %v1450 = vunpack.c.l.b16 %v1322
      %v1451 = vunpack.c.l.b16 %v1323
      %v1452 = vunpack.c.l.b16 %v1324
      %v1453 = vunpack.c.l.b16 %v1325
      %v1454 = vunpack.c.l.b16 %v1326
      %v1455 = vunpack.c.l.b16 %v1327
      %v1456 = vunpack.c.l.b16 %v1328
      %v1457 = vunpack.c.l.b16 %v1329
      %v1458 = vunpack.c.l.b16 %v1330
      %v1459 = vunpack.c.l.b16 %v1331
      %v1460 = vunpack.c.l.b16 %v1332
      %v1461 = vpack.c.b16 %v1446, %v1445
      %v1462 = vpack.c.b16 %v1448, %v1447
      %v1463 = vpack.c.b16 %v1450, %v1449
      %v1464 = vpack.c.b16 %v1452, %v1451
      %v1465 = vpack.c.b16 %v1454, %v1453
      %v1466 = vpack.c.b16 %v1456, %v1455
      %v1467 = vpack.c.b16 %v1458, %v1457
      %v1468 = vpack.c.b16 %v1460, %v1459
      %1477 = vmatprep.subr.bf16.mxu0 0
      %1478 = vmatpush1.bf16.msra.mxu0 %v1316
      %1479 = vmatprep.subr.bf16.mxu0 0
      %1480 = vmatpush1.bf16.msra.mxu0 %v1315
      %1481 = vmatprep.subr.bf16.mxu0 0
      %1482 = vmatpush1.bf16.msra.mxu0 %v1314
      %1483 = vmatprep.subr.bf16.mxu0 0
      %1484 = vmatpush1.bf16.msra.mxu0 %v1313
      %1485 = vmatprep.subr.bf16.mxu0 0
      %1486 = vmatpush1.bf16.msra.mxu0 %v1312
      %1487 = vmatprep.subr.bf16.mxu0 0
      %1488 = vmatpush1.bf16.msra.mxu0 %v1311
      %1489 = vmatprep.subr.bf16.mxu0 0
      %1490 = vmatpush1.bf16.msra.mxu0 %v1310
      %1491 = vmatprep.subr.bf16.mxu0 0
      %1492 = vmatpush1.bf16.msra.mxu0 %v1309
      %1493 = vmatprep.subr.bf16.mxu0 0
      %1494 = vmatpush2.bf16.msra.mxu0 0
      %1495 = vmatprep.subr.bf16.mxu0 0
      %1496 = vmatpush2.bf16.msra.mxu0 0
      %1497 = vmatprep.subr.bf16.mxu0 0
      %1498 = vmatpush2.bf16.msra.mxu0 0
      %1499 = vmatprep.subr.bf16.mxu0 0
      %1500 = vmatpush2.bf16.msra.mxu0 0
      %1501 = vmatprep.subr.bf16.mxu0 0
      %1502 = vmatpush2.bf16.msra.mxu0 0
      %1503 = vmatprep.subr.bf16.mxu0 0
      %1504 = vmatpush2.bf16.msra.mxu0 0
      %1505 = vmatprep.subr.bf16.mxu0 0
      %1506 = vmatpush2.bf16.msra.mxu0 0
      %1507 = vmatprep.subr.bf16.mxu0 0
      %1508 = vmatpush2.bf16.msra.mxu0 0
      %1509 = vmatprep.mubr.bf16.mxu0 0
      %1510 = vmatmul.mubr.bf16.gmra.mxu0 %v1461
      %v1511 = vpop.f32.mrf.mxu0
      %v1512 = vadd.f32 %v1352, %v1511
      %v1513 = vpop.f32.mrf.mxu0
      %v1514 = vpop.f32.mrf.mxu0
      %v1515 = vadd.f32 %v1357, %v1514
      %v1516 = vpop.f32.mrf.mxu0
      %1517 = vmatprep.mubr.bf16.mxu0 0
      %1518 = vmatmul.mubr.bf16.gmra.mxu0 %v1462
      %v1519 = vpop.f32.mrf.mxu0
      %v1520 = vadd.f32 %v1362, %v1519
      %v1521 = vpop.f32.mrf.mxu0
      %v1522 = vpop.f32.mrf.mxu0
      %v1523 = vadd.f32 %v1367, %v1522
      %v1524 = vpop.f32.mrf.mxu0
      %1525 = vmatprep.mubr.bf16.mxu0 0
      %1526 = vmatmul.mubr.bf16.gmra.mxu0 %v1463
      %v1527 = vpop.f32.mrf.mxu0
      %v1528 = vadd.f32 %v1372, %v1527
      %v1529 = vpop.f32.mrf.mxu0
      %v1530 = vpop.f32.mrf.mxu0
      %v1531 = vadd.f32 %v1377, %v1530
      %v1532 = vpop.f32.mrf.mxu0
      %1533 = vmatprep.mubr.bf16.mxu0 0
      %1534 = vmatmul.mubr.bf16.gmra.mxu0 %v1464
      %v1535 = vpop.f32.mrf.mxu0
      %v1536 = vadd.f32 %v1382, %v1535
      %v1537 = vpop.f32.mrf.mxu0
      %v1538 = vpop.f32.mrf.mxu0
      %v1539 = vadd.f32 %v1387, %v1538
      %v1540 = vpop.f32.mrf.mxu0
      %1541 = vmatprep.mubr.bf16.mxu0 0
      %1542 = vmatmul.mubr.bf16.gmra.mxu0 %v1465
      %v1543 = vpop.f32.mrf.mxu0
      %v1544 = vadd.f32 %v1392, %v1543
      %v1545 = vpop.f32.mrf.mxu0
      %v1546 = vpop.f32.mrf.mxu0
      %v1547 = vadd.f32 %v1397, %v1546
      %v1548 = vpop.f32.mrf.mxu0
      %1549 = vmatprep.mubr.bf16.mxu0 0
      %1550 = vmatmul.mubr.bf16.gmra.mxu0 %v1466
      %v1551 = vpop.f32.mrf.mxu0
      %v1552 = vadd.f32 %v1402, %v1551
      %v1553 = vpop.f32.mrf.mxu0
      %v1554 = vpop.f32.mrf.mxu0
      %v1555 = vadd.f32 %v1407, %v1554
      %v1556 = vpop.f32.mrf.mxu0
      %1557 = vmatprep.mubr.bf16.mxu0 0
      %1558 = vmatmul.mubr.bf16.gmra.mxu0 %v1467
      %v1559 = vpop.f32.mrf.mxu0
      %v1560 = vadd.f32 %v1412, %v1559
      %v1561 = vpop.f32.mrf.mxu0
      %v1562 = vpop.f32.mrf.mxu0
      %v1563 = vadd.f32 %v1417, %v1562
      %v1564 = vpop.f32.mrf.mxu0
      %1565 = vmatprep.mubr.bf16.mxu0 0
      %1566 = vmatmul.mubr.bf16.gmra.mxu0 %v1468
      %v1567 = vpop.f32.mrf.mxu0
      %v1568 = vadd.f32 %v1422, %v1567
      %v1569 = vpop.f32.mrf.mxu0
      %v1570 = vpop.f32.mrf.mxu0
      %v1571 = vadd.f32 %v1427, %v1570
      %v1572 = vpop.f32.mrf.mxu0
      %1573 = vdwg.mxu0
      %v1574 = vmax.f32 %v1512, 0.0
      %v1575 = vmax.f32 %v1515, 0.0
      %v1576 = vmax.f32 %v1520, 0.0
      %v1577 = vmax.f32 %v1523, 0.0
      %v1578 = vmax.f32 %v1528, 0.0
      %v1579 = vmax.f32 %v1531, 0.0
      %v1580 = vmax.f32 %v1536, 0.0
      %v1581 = vmax.f32 %v1539, 0.0
      %v1582 = vmax.f32 %v1544, 0.0
      %v1583 = vmax.f32 %v1547, 0.0
      %v1584 = vmax.f32 %v1552, 0.0
      %v1585 = vmax.f32 %v1555, 0.0
      %v1586 = vmax.f32 %v1560, 0.0
      %v1587 = vmax.f32 %v1563, 0.0
      %v1588 = vmax.f32 %v1568, 0.0
      %v1589 = vmax.f32 %v1571, 0.0
      %v1590 = vpack.c.bf16 %v1575, %v1574
      %v1591 = vpack.c.bf16 %v1577, %v1576
      %v1592 = vpack.c.bf16 %v1579, %v1578
      %v1593 = vpack.c.bf16 %v1581, %v1580
      %v1594 = vpack.c.bf16 %v1583, %v1582
      %v1595 = vpack.c.bf16 %v1585, %v1584
      %v1596 = vpack.c.bf16 %v1587, %v1586
      %v1597 = vpack.c.bf16 %v1589, %v1588
      %v1598 = vld [vmem:[%s7] sm:$0x3]
      %v1599 = vld [vmem:[%s8] sm:$0x7]
      %1601 = vset.pattern.permute.xlu0 0
      %1602 = vperm.xlu0 %1601, %v1599
      %v1603 = vpop.permute.xlu0 %1602
      %1605 = vmatprep.subr.bf16.mxu0 0
      %1606 = vmatpush1.bf16.msra.mxu0 %v1597
      %1607 = vmatprep.subr.bf16.mxu0 0
      %1608 = vmatpush1.bf16.msra.mxu0 %v1596
      %1609 = vmatprep.subr.bf16.mxu0 0
      %1610 = vmatpush1.bf16.msra.mxu0 %v1595
      %1611 = vmatprep.subr.bf16.mxu0 0
      %1612 = vmatpush1.bf16.msra.mxu0 %v1594
      %1613 = vmatprep.subr.bf16.mxu0 0
      %1614 = vmatpush1.bf16.msra.mxu0 %v1593
      %1615 = vmatprep.subr.bf16.mxu0 0
      %1616 = vmatpush1.bf16.msra.mxu0 %v1592
      %1617 = vmatprep.subr.bf16.mxu0 0
      %1618 = vmatpush1.bf16.msra.mxu0 %v1591
      %1619 = vmatprep.subr.bf16.mxu0 0
      %1620 = vmatpush1.bf16.msra.mxu0 %v1590
      %1621 = vmatprep.subr.bf16.mxu0 0
      %1622 = vmatpush2.bf16.msra.mxu0 0
      %1623 = vmatprep.subr.bf16.mxu0 0
      %1624 = vmatpush2.bf16.msra.mxu0 0
      %1625 = vmatprep.subr.bf16.mxu0 0
      %1626 = vmatpush2.bf16.msra.mxu0 0
      %1627 = vmatprep.subr.bf16.mxu0 0
      %1628 = vmatpush2.bf16.msra.mxu0 0
      %1629 = vmatprep.subr.bf16.mxu0 0
      %1630 = vmatpush2.bf16.msra.mxu0 0
      %1631 = vmatprep.subr.bf16.mxu0 0
      %1632 = vmatpush2.bf16.msra.mxu0 0
      %1633 = vmatprep.subr.bf16.mxu0 0
      %1634 = vmatpush2.bf16.msra.mxu0 0
      %1635 = vmatprep.subr.bf16.mxu0 0
      %1636 = vmatpush2.bf16.msra.mxu0 0
      %1637 = vmatprep.mubr.bf16.mxu0 0
      %1638 = vmatmul.mubr.bf16.gmra.mxu0 %v1598
      %v1639 = vpop.f32.mrf.mxu0
      %v1640 = vadd.f32 %v1603, %v1639
      %v1641 = vpop.f32.mrf.mxu0
      %v1642 = vpop.f32.mrf.mxu0
      %v1643 = vpop.f32.mrf.mxu0
      %1644 = vdwg.mxu0
      %v1645 = vtanh.pop %v1640
      %1646 = vst [vmem:[%s361] sm:$0x7] %v1645
      %p1647 = scmp.lt.s32.totalorder %s25, 1
      %s1648 = scalar_select %p1647, %s25, 1
      %p1649 = scmp.lt.s32.totalorder %s24, 0
      %s1650 = scalar_select %p1649, %s24, 0
      %s1651 = sadd.s32 %s1650, %s1648
      %s1652 = smul.addr %s1651, 4
      %s1653 = scalar_lea.vmem %s9, %s1652
      // Predicated region
      $region57: #{_pointgencon_impl.1} parent=55 // pred_check
        %p1654 = pneg %p248
      $region58: #{_pointgencon_impl.1} parent=55 // pred_check_branch
        %1656 = sbr.rel (%p1654) target = $region60
      $region59: #{_pointgencon_impl.1} parent=55 // pred_region
        _
      $region60: #{_pointgencon_impl.1} parent=55 // pred_fallthru
        _
    $region56: #{_pointgencon_impl.1} parent=5 // pred_fallthru
      _
    %p1657 = scmp.le.s32.totalorder 2, %s15
    // Predicated region
    $region61: #{_pointgencon_impl.1} parent=5 // pred_check
      %p1658 = pneg %p1657
    $region62: #{_pointgencon_impl.1} parent=5 // pred_check_branch
      %1660 = sbr.rel (%p1658) target = $region64
    $region63: #{_pointgencon_impl.1} parent=5 // pred_region
      %s1661 = ssub.s32 %s15, 2
      // Predicated region
      $region65: #{_pointgencon_impl.1} parent=63 // pred_check
        %p1662 = pneg %p254
      $region66: #{_pointgencon_impl.1} parent=63 // pred_check_branch
        %1664 = sbr.rel (%p1662) target = $region68
      $region67: #{_pointgencon_impl.1} parent=63 // pred_region
        %p1665 = scmp.lt.s32.totalorder %s27, 1
        %s1666 = scalar_select %p1665, %s27, 1
        %p1667 = scmp.lt.s32.totalorder %s26, 0
        %s1668 = scalar_select %p1667, %s26, 0
        %s1669 = sadd.s32 %s1668, %s1666
        %s1670 = smul.addr %s1669, 4
        %s1671 = scalar_lea.vmem %s9, %s1670
      $region68: #{_pointgencon_impl.1} parent=63 // pred_fallthru
        _
    $region64: #{_pointgencon_impl.1} parent=5 // pred_fallthru
      _
  $region6: #{_pointgencon_impl.1} parent=0 // loop_footer
    %s19 = sadd.s32 1, %s15
  $region7: #{_pointgencon_impl.1} parent=0 // loop_footer_branch
    %14 = sbr.rel target = $region3
  $region8: #{_pointgencon_impl.1} parent=0 // loop_exit
    _

</llo_original>
